<compile_context>
chip_gen: v7x
topology: tpu7x:2x2x1
jax: 0.10.0
libtpu: 0.0.40
codegen_flags: <defaults>
</compile_context>

<pallas_src>
import functools

import jax
import jax.numpy as jnp
from jax.experimental import pallas as pl
from jax.experimental.pallas import tpu as pltpu

LANE = 128


def _round_up(x, m):
    return (x + m - 1) // m * m


def _vmem_capacity_bytes():
    try:
        cap = int(pltpu.get_tpu_info().vmem_capacity_bytes)
        if cap > 0:
            return cap
    except Exception:
        pass
    return 64 << 20                       # conservative fallback (v7x per-TC physical)


_VMEM_CAPACITY = _vmem_capacity_bytes()
# Explicit scoped-VMEM limit; leave headroom for compiler-internal scratch.
_VMEM_LIMIT = min(int(_VMEM_CAPACITY * 3 // 4), 112 << 20)


# ----------------------------------------------------------------------------
# Shared conv body: 3x3 conv of one H-band via 3 dots with K = 3*Cin
# ----------------------------------------------------------------------------
def _conv_band(x_ref, w_ref):
    """x_ref: (1, hb+2, W, C3) kw-expanded padded band; w_ref: (3, C3, Cp).

    Returns f32 (hb*W, Cp). The band is flattened ONCE (free sublane merge when
    W % 8 == 0); each kh tap is then a contiguous row-range slice, so there are no
    per-tap re-layout copies and only two accumulator adds.
    """
    _, hp2, W, C3 = x_ref.shape
    hb = hp2 - 2
    rows = hb * W
    xf = x_ref[...].reshape(hp2 * W, C3)
    acc = jnp.dot(xf[0:rows], w_ref[0], preferred_element_type=jnp.float32)
    acc = acc + jnp.dot(xf[W:W + rows], w_ref[1], preferred_element_type=jnp.float32)
    acc = acc + jnp.dot(xf[2 * W:2 * W + rows], w_ref[2],
                        preferred_element_type=jnp.float32)
    return acc


# ----------------------------------------------------------------------------
# Pass 1: conv + per-band channel statistics (no conv activation written to HBM)
# ----------------------------------------------------------------------------
def _conv_stats_kernel(x_ref, w_ref, sum_ref, ssq_ref):
    acc = _conv_band(x_ref, w_ref)                       # (rows, Cp) f32
    rows = acc.shape[0]
    P = sum_ref.shape[1]
    if P == 8:
        a3 = acc.reshape(rows // 8, 8, -1)               # split sublane dim: VALU adds only
        sum_ref[...] = jnp.sum(a3, axis=0, keepdims=True)
        ssq_ref[...] = jnp.sum(a3 * a3, axis=0, keepdims=True)
    else:                                                # tiny / odd bands
        sum_ref[...] = jnp.sum(acc, axis=0, keepdims=True)[None]
        ssq_ref[...] = jnp.sum(acc * acc, axis=0, keepdims=True)[None]


def _conv_stats(xb, wk, *, P):
    G, hp2, W, C3 = xb.shape
    Cp = wk.shape[-1]
    return pl.pallas_call(
        _conv_stats_kernel,
        out_shape=(jax.ShapeDtypeStruct((G, P, Cp), jnp.float32),
                   jax.ShapeDtypeStruct((G, P, Cp), jnp.float32)),
        grid_spec=pltpu.PrefetchScalarGridSpec(
            num_scalar_prefetch=0,
            grid=(G,),
            in_specs=[pl.BlockSpec((1, hp2, W, C3), lambda g: (g, 0, 0, 0)),
                      pl.BlockSpec(wk.shape, lambda g: (0, 0, 0))],       # resident weights
            out_specs=[pl.BlockSpec((1, P, Cp), lambda g: (g, 0, 0)),
                       pl.BlockSpec((1, P, Cp), lambda g: (g, 0, 0))]),
        compiler_params=pltpu.CompilerParams(
            dimension_semantics=("parallel",), vmem_limit_bytes=_VMEM_LIMIT),
    )(xb, wk)


# ----------------------------------------------------------------------------
# Pass 2: recompute conv, fuse BN scale/shift + ReLU + 2x2 max-pool
# ----------------------------------------------------------------------------
def _conv_bn_relu_pool_kernel(x_ref, w_ref, scale_ref, shift_ref, o_ref, z_sc):
    # x_ref: (1, hb+2, W, C3); w_ref: (3, C3, Cp); scale/shift: (1, Cp)
    # o_ref: (hb//2, Wo, Cp);  z_sc: (hb//2, 2, W, Cp) VMEM scratch (row parity on dim 1)
    acc = _conv_band(x_ref, w_ref)                                   # (hb*W, Cp) f32
    y = jnp.maximum(acc * scale_ref[...] + shift_ref[...], 0.0)      # BN + ReLU
    z_sc[...] = y.reshape(z_sc.shape)
    Wo = o_ref.shape[1]
    ev = z_sc[:, :, pl.ds(0, Wo, stride=2), :]                       # column parity via
    od = z_sc[:, :, pl.ds(1, Wo, stride=2), :]                       # strided sublane loads
    m = jnp.maximum(ev, od)
    o_ref[...] = jnp.maximum(m[:, 0], m[:, 1])                       # pool over row parity


def _conv_bn_relu_pool(xb, wk, scale, shift, *, hb):
    G, hp2, W, C3 = xb.shape
    Cp = wk.shape[-1]
    ho_b, Wo = hb // 2, W // 2
    return pl.pallas_call(
        _conv_bn_relu_pool_kernel,
        out_shape=jax.ShapeDtypeStruct((G * ho_b, Wo, Cp), jnp.float32),
        grid_spec=pltpu.PrefetchScalarGridSpec(
            num_scalar_prefetch=0,
            grid=(G,),
            in_specs=[pl.BlockSpec((1, hp2, W, C3), lambda g: (g, 0, 0, 0)),
                      pl.BlockSpec(wk.shape, lambda g: (0, 0, 0)),
                      pl.BlockSpec((1, Cp), lambda g: (0, 0)),
                      pl.BlockSpec((1, Cp), lambda g: (0, 0))],
            out_specs=pl.BlockSpec((ho_b, Wo, Cp), lambda g: (g, 0, 0)),   # lane-dense store
            scratch_shapes=[pltpu.VMEM((ho_b, 2, W, Cp), jnp.float32)]),
        compiler_params=pltpu.CompilerParams(
            dimension_semantics=("parallel",), vmem_limit_bytes=_VMEM_LIMIT),
    )(xb, wk, scale, shift)


# ----------------------------------------------------------------------------
# Band-size picker: largest even hb dividing H whose per-step footprint fits VMEM
# ----------------------------------------------------------------------------
def _pick_band_height(H, W, C3, Cp):
    budget = int(_VMEM_LIMIT * 0.55)
    c3p = _round_up(C3, LANE)                     # small channel counts are lane-padded in VMEM
    w8 = _round_up(W, 8)
    wo8 = _round_up(max(W // 2, 1), 8)

    def footprint(hb):
        in_blk = 2 * (hb + 2) * w8 * c3p * 4      # double-buffered input band
        out_blk = 2 * (hb // 2) * wo8 * Cp * 4    # double-buffered pooled output
        big = 3 * hb * W * Cp * 4                 # f32 acc value + pool scratch + one temp
        wts = 2 * 3 * _round_up(C3, 8) * Cp * 4   # weights (double-buffered, tiny)
        return in_blk + out_blk + big + wts + (256 << 10)

    hbs = sorted((h for h in range(2, H + 1, 2) if H % h == 0), reverse=True)
    for hb in hbs:
        if footprint(hb) <= budget:
            return hb
    # TODO(synk): add W tiling for images too wide to fit even a 2-row band in VMEM.
    return hbs[-1]


# ----------------------------------------------------------------------------
# ConvBlock forward (wrapper glue + the two passes)
# ----------------------------------------------------------------------------
@functools.partial(jax.jit, static_argnames=("eps", "use_bf16"))
def conv_block_forward(x_nchw, conv_w, conv_b, bn_gamma, bn_beta, eps=1e-5,
                       use_bf16=False):
    """x_nchw: [N, Cin, H, W]; conv_w: [Cout, Cin, 3, 3] -> [N, Cout, H//2, W//2]."""
    N, Cin, H, W = x_nchw.shape
    Cout = conv_w.shape[0]
    assert conv_w.shape[2] == 3 and conv_w.shape[3] == 3, "3x3 / padding=1 case"
    assert H % 2 == 0 and W % 2 == 0, "2x2 max-pool needs even spatial dims"
    # TODO(synk): support kernel_size != 3 and odd H/W (MaxPool ceil_mode=False tails).

    Cp = _round_up(max(Cout, LANE), LANE)        # lane-dense channel padding
    C3 = 3 * Cin
    Ho, Wo = H // 2, W // 2
    M = N * H * W

    # ---- wrapper layout: NCHW -> NHWC, kw-expanded channels, H-padded, H-banded ----
    x = jnp.transpose(x_nchw, (0, 2, 3, 1)).astype(jnp.float32)          # (N,H,W,Cin)
    xw = jnp.pad(x, ((0, 0), (0, 0), (1, 1), (0, 0)))                    # pad W by 1
    xkw = jnp.concatenate([xw[:, :, 0:W], xw[:, :, 1:W + 1], xw[:, :, 2:W + 2]],
                          axis=-1)                                       # (N,H,W,3Cin)
    xkwp = jnp.pad(xkw, ((0, 0), (1, 1), (0, 0), (0, 0)))                # (N,H+2,W,3Cin)

    hb = _pick_band_height(H, W, C3, Cp)
    nb = H // hb
    if nb == 1:
        xb = xkwp                                                        # (N, H+2, W, C3)
    else:                                                                # duplicate 2-row halo
        ridx = jnp.arange(nb)[:, None] * hb + jnp.arange(hb + 2)[None, :]
        xb = xkwp[:, ridx].reshape(N * nb, hb + 2, W, C3)

    # weights: (Cout,Cin,3,3) -> (3, 3*Cin, Cp): kh-major taps, kw folded into K
    wk = jnp.transpose(conv_w.astype(jnp.float32), (2, 3, 1, 0)).reshape(3, C3, Cout)
    wk = jnp.pad(wk, ((0, 0), (0, 0), (0, Cp - Cout)))

    if use_bf16:                              # optionally halve the input HBM streams
        xb = xb.astype(jnp.bfloat16)
        wk = wk.astype(jnp.bfloat16)

    # NOTE: conv bias (conv_b) is intentionally NOT applied: with train-mode BatchNorm
    # immediately after the conv, a per-channel bias cancels exactly (the batch mean
    # absorbs it, the variance is unchanged, the shift removes it).
    del conv_b

    # ---- pass 1: conv + per-band channel stats ----
    P = 8 if (hb * W) % 8 == 0 else 1
    g_sum, g_ssq = _conv_stats(xb, wk, P=P)

    # ---- BatchNorm batch statistics (training mode, biased variance) ----
    # One-pass E[x^2] - mean^2 in f32; conv activations have |mean| ~ std so the
    # cancellation risk is negligible here, and padded channels reduce to exactly 0.
    ch_sum = jnp.sum(g_sum, axis=(0, 1))
    ch_ssq = jnp.sum(g_ssq, axis=(0, 1))
    mean = ch_sum / M
    var = jnp.maximum(ch_ssq / M - mean * mean, 0.0)
    gamma_p = jnp.pad(bn_gamma.astype(jnp.float32), (0, Cp - Cout))
    beta_p = jnp.pad(bn_beta.astype(jnp.float32), (0, Cp - Cout))
    scale = gamma_p * jax.lax.rsqrt(var + eps)
    shift = beta_p - mean * scale
    scale = scale.reshape(1, Cp)
    shift = shift.reshape(1, Cp)

    # ---- pass 2: recompute conv, fuse BN + ReLU + 2x2 max-pool, write pooled only ----
    pooled = _conv_bn_relu_pool(xb, wk, scale, shift, hb=hb)             # (N*Ho, Wo, Cp)

    # ---- back to NCHW, strip channel padding ----
    # TODO(synk): when stacking ConvBlocks, keep activations in NHWC/Cp between blocks
    # so both wrapper transposes disappear.
    out = pooled.reshape(N, Ho, Wo, Cp)[..., :Cout]
    return jnp.transpose(out, (0, 3, 1, 2))


# ----------------------------------------------------------------------------
# Pure-JAX reference (for correctness sanity check)
# ----------------------------------------------------------------------------
def _reference_forward(x, conv_w, conv_b, bn_gamma, bn_beta, eps=1e-5):
    y = jax.lax.conv_general_dilated(
        x.astype(jnp.float32), conv_w.astype(jnp.float32),
        window_strides=(1, 1), padding=((1, 1), (1, 1)),
        dimension_numbers=("NCHW", "OIHW", "NCHW"))
    y = y + conv_b.reshape(1, -1, 1, 1)
    mean = jnp.mean(y, axis=(0, 2, 3), keepdims=True)
    var = jnp.var(y, axis=(0, 2, 3), keepdims=True)
    y = (y - mean) * jax.lax.rsqrt(var + eps)
    y = y * bn_gamma.reshape(1, -1, 1, 1) + bn_beta.reshape(1, -1, 1, 1)
    y = jnp.maximum(y, 0.0)
    N, C, H, W = y.shape
    y = y.reshape(N, C, H // 2, 2, W // 2, 2)
    return jnp.max(y, axis=(3, 5))


# ----------------------------------------------------------------------------
# Deterministic parameter init (matches the PyTorch __init__ semantics)
# ----------------------------------------------------------------------------
def init_params(key, in_channels, out_channels, kernel_size):
    k_w, k_g = jax.random.split(key)
    fan_in = in_channels * kernel_size * kernel_size
    fan_out = out_channels * kernel_size * kernel_size
    bound = (6.0 / (fan_in + fan_out)) ** 0.5                    # xavier_uniform_, gain=1
    conv_w = jax.random.uniform(
        k_w, (out_channels, in_channels, kernel_size, kernel_size),
        minval=-bound, maxval=bound, dtype=jnp.float32)
    conv_b = jnp.zeros((out_channels,), jnp.float32)             # constant_(bias, 0)
    bn_gamma = jax.random.uniform(k_g, (out_channels,), dtype=jnp.float32)  # uniform_(weight)
    bn_beta = jnp.zeros((out_channels,), jnp.float32)            # BN bias default 0
    return conv_w, conv_b, bn_gamma, bn_beta


if __name__ == "__main__":
    key = jax.random.PRNGKey(0)
    k_x, k_p = jax.random.split(key)

    N, Cin, H, W = 2, 4, 16, 16
    Cout, Ksz = 8, 3

    x = jax.random.normal(k_x, (N, Cin, H, W), dtype=jnp.float32)
    conv_w, conv_b, bn_gamma, bn_beta = init_params(k_p, Cin, Cout, Ksz)

    out = conv_block_forward(x, conv_w, conv_b, bn_gamma, bn_beta)
    out = jax.block_until_ready(out)
    assert out.shape == (N, Cout, H // 2, W // 2), out.shape
    assert out.dtype == jnp.float32

    ref = _reference_forward(x, conv_w, conv_b, bn_gamma, bn_beta)
    err = float(jnp.max(jnp.abs(out - ref)))
    assert err < 1e-3, f"max abs error vs reference = {err}"

    print("KERNEL_OK")
</pallas_src>

<mosaic_0001>
module attributes {stable_mosaic.version = 11 : i64} {
  func.func @_conv_stats_kernel(%arg0: i32, %arg1: memref<1x18x16x12xf32, #tpu.memory_space<vmem>>, %arg2: memref<3x12x128xf32, #tpu.memory_space<vmem>>, %arg3: memref<1x8x128xf32, #tpu.memory_space<vmem>>, %arg4: memref<1x8x128xf32, #tpu.memory_space<vmem>>) attributes {dimension_semantics = [#tpu.dimension_semantics<parallel>], iteration_bounds = array<i64: 2>, scalar_prefetch = 0 : i64, scratch_operands = 0 : i64, tpu.core_type = #tpu.core_type<tc>, window_params = [{transform_indices = @transform_0, window_bounds = array<i64: 1, 18, 16, 12>}, {pipeline_mode = #tpu.pipeline_mode<synchronous>, transform_indices = @transform_1, window_bounds = array<i64: 3, 12, 128>}, {transform_indices = @transform_2, window_bounds = array<i64: 1, 8, 128>}, {transform_indices = @transform_3, window_bounds = array<i64: 1, 8, 128>}]} {
    %c0 = arith.constant 0 : index
    %c0_0 = arith.constant 0 : index
    %c0_1 = arith.constant 0 : index
    %c0_2 = arith.constant 0 : index
    %0 = vector.load %arg1[%c0, %c0_0, %c0_1, %c0_2] : memref<1x18x16x12xf32, #tpu.memory_space<vmem>>, vector<1x18x16x12xf32>
    %1 = vector.shape_cast %0 : vector<1x18x16x12xf32> to vector<288x12xf32>
    %2 = vector.extract_strided_slice %1 {offsets = [0, 0], sizes = [256, 12], strides = [1, 1]} : vector<288x12xf32> to vector<256x12xf32>
    %c0_3 = arith.constant 0 : index
    %c0_4 = arith.constant 0 : index
    %c0_5 = arith.constant 0 : index
    %3 = vector.load %arg2[%c0_3, %c0_4, %c0_5] : memref<3x12x128xf32, #tpu.memory_space<vmem>>, vector<1x12x128xf32>
    %4 = vector.shape_cast %3 : vector<1x12x128xf32> to vector<12x128xf32>
    %cst = arith.constant dense<0.000000e+00> : vector<256x128xf32>
    %5 = tpu.matmul %2, %4, %cst {dimension_numbers = #tpu.dot_dimension_numbers<[1], [0], [0], [1], [0, 0, 1, 1], [], []>} : vector<256x12xf32>, vector<12x128xf32>, vector<256x128xf32> -> vector<256x128xf32>
    %6 = vector.extract_strided_slice %1 {offsets = [16, 0], sizes = [256, 12], strides = [1, 1]} : vector<288x12xf32> to vector<256x12xf32>
    %c1 = arith.constant 1 : index
    %c0_6 = arith.constant 0 : index
    %c0_7 = arith.constant 0 : index
    %7 = vector.load %arg2[%c1, %c0_6, %c0_7] : memref<3x12x128xf32, #tpu.memory_space<vmem>>, vector<1x12x128xf32>
    %8 = vector.shape_cast %7 : vector<1x12x128xf32> to vector<12x128xf32>
    %cst_8 = arith.constant dense<0.000000e+00> : vector<256x128xf32>
    %9 = tpu.matmul %6, %8, %cst_8 {dimension_numbers = #tpu.dot_dimension_numbers<[1], [0], [0], [1], [0, 0, 1, 1], [], []>} : vector<256x12xf32>, vector<12x128xf32>, vector<256x128xf32> -> vector<256x128xf32>
    %10 = arith.addf %5, %9 : vector<256x128xf32>
    %11 = vector.extract_strided_slice %1 {offsets = [32, 0], sizes = [256, 12], strides = [1, 1]} : vector<288x12xf32> to vector<256x12xf32>
    %c2 = arith.constant 2 : index
    %c0_9 = arith.constant 0 : index
    %c0_10 = arith.constant 0 : index
    %12 = vector.load %arg2[%c2, %c0_9, %c0_10] : memref<3x12x128xf32, #tpu.memory_space<vmem>>, vector<1x12x128xf32>
    %13 = vector.shape_cast %12 : vector<1x12x128xf32> to vector<12x128xf32>
    %cst_11 = arith.constant dense<0.000000e+00> : vector<256x128xf32>
    %14 = tpu.matmul %11, %13, %cst_11 {dimension_numbers = #tpu.dot_dimension_numbers<[1], [0], [0], [1], [0, 0, 1, 1], [], []>} : vector<256x12xf32>, vector<12x128xf32>, vector<256x128xf32> -> vector<256x128xf32>
    %15 = arith.addf %10, %14 : vector<256x128xf32>
    %16 = vector.shape_cast %15 : vector<256x128xf32> to vector<32x8x128xf32>
    %cst_12 = arith.constant dense<0.000000e+00> : vector<8x128xf32>
    %17 = vector.multi_reduction <add>, %16, %cst_12 [0] : vector<32x8x128xf32> to vector<8x128xf32>
    %18 = vector.shape_cast %17 : vector<8x128xf32> to vector<1x8x128xf32>
    %c0_13 = arith.constant 0 : index
    %c0_14 = arith.constant 0 : index
    %c0_15 = arith.constant 0 : index
    %19 = vector.load %arg3[%c0_13, %c0_14, %c0_15] : memref<1x8x128xf32, #tpu.memory_space<vmem>>, vector<1x8x128xf32>
    tpu.vector_store %arg3[%c0_13, %c0_14, %c0_15], %18 {strides = array<i32>} : memref<1x8x128xf32, #tpu.memory_space<vmem>>, vector<1x8x128xf32>,
    %20 = arith.mulf %16, %16 : vector<32x8x128xf32>
    %cst_16 = arith.constant dense<0.000000e+00> : vector<8x128xf32>
    %21 = vector.multi_reduction <add>, %20, %cst_16 [0] : vector<32x8x128xf32> to vector<8x128xf32>
    %22 = vector.shape_cast %21 : vector<8x128xf32> to vector<1x8x128xf32>
    %c0_17 = arith.constant 0 : index
    %c0_18 = arith.constant 0 : index
    %c0_19 = arith.constant 0 : index
    %23 = vector.load %arg4[%c0_17, %c0_18, %c0_19] : memref<1x8x128xf32, #tpu.memory_space<vmem>>, vector<1x8x128xf32>
    tpu.vector_store %arg4[%c0_17, %c0_18, %c0_19], %22 {strides = array<i32>} : memref<1x8x128xf32, #tpu.memory_space<vmem>>, vector<1x8x128xf32>,
    return
  }
  func.func @transform_0(%arg0: i32) -> (i32, i32, i32, i32) {
    %c0_i32 = arith.constant 0 : i32
    %c0_i32_0 = arith.constant 0 : i32
    %c0_i32_1 = arith.constant 0 : i32
    %c0_i32_2 = arith.constant 0 : i32
    return %arg0, %c0_i32, %c0_i32_0, %c0_i32_1 : i32, i32, i32, i32
  }
  func.func @transform_1(%arg0: i32) -> (i32, i32, i32) {
    %c0_i32 = arith.constant 0 : i32
    %c0_i32_0 = arith.constant 0 : i32
    %c0_i32_1 = arith.constant 0 : i32
    %c0_i32_2 = arith.constant 0 : i32
    return %c0_i32, %c0_i32_0, %c0_i32_1 : i32, i32, i32
  }
  func.func @transform_2(%arg0: i32) -> (i32, i32, i32) {
    %c0_i32 = arith.constant 0 : i32
    %c0_i32_0 = arith.constant 0 : i32
    %c0_i32_1 = arith.constant 0 : i32
    return %arg0, %c0_i32, %c0_i32_0 : i32, i32, i32
  }
  func.func @transform_3(%arg0: i32) -> (i32, i32, i32) {
    %c0_i32 = arith.constant 0 : i32
    %c0_i32_0 = arith.constant 0 : i32
    %c0_i32_1 = arith.constant 0 : i32
    return %arg0, %c0_i32, %c0_i32_0 : i32, i32, i32
  }
}

module attributes {stable_mosaic.version = 11 : i64} {
  func.func @_conv_bn_relu_pool_kernel(%arg0: i32, %arg1: memref<1x18x16x12xf32, #tpu.memory_space<vmem>>, %arg2: memref<3x12x128xf32, #tpu.memory_space<vmem>>, %arg3: memref<1x128xf32, #tpu.memory_space<vmem>>, %arg4: memref<1x128xf32, #tpu.memory_space<vmem>>, %arg5: memref<8x8x128xf32, #tpu.memory_space<vmem>>, %arg6: memref<8x2x16x128xf32, #tpu.memory_space<vmem>>) attributes {dimension_semantics = [#tpu.dimension_semantics<parallel>], iteration_bounds = array<i64: 2>, scalar_prefetch = 0 : i64, scratch_operands = 1 : i64, tpu.core_type = #tpu.core_type<tc>, window_params = [{transform_indices = @transform_0, window_bounds = array<i64: 1, 18, 16, 12>}, {pipeline_mode = #tpu.pipeline_mode<synchronous>, transform_indices = @transform_1, window_bounds = array<i64: 3, 12, 128>}, {pipeline_mode = #tpu.pipeline_mode<synchronous>, transform_indices = @transform_2, window_bounds = array<i64: 1, 128>}, {pipeline_mode = #tpu.pipeline_mode<synchronous>, transform_indices = @transform_3, window_bounds = array<i64: 1, 128>}, {transform_indices = @transform_4, window_bounds = array<i64: 8, 8, 128>}]} {
    %c0 = arith.constant 0 : index
    %c0_0 = arith.constant 0 : index
    %c0_1 = arith.constant 0 : index
    %c0_2 = arith.constant 0 : index
    %0 = vector.load %arg1[%c0, %c0_0, %c0_1, %c0_2] : memref<1x18x16x12xf32, #tpu.memory_space<vmem>>, vector<1x18x16x12xf32>
    %1 = vector.shape_cast %0 : vector<1x18x16x12xf32> to vector<288x12xf32>
    %2 = vector.extract_strided_slice %1 {offsets = [0, 0], sizes = [256, 12], strides = [1, 1]} : vector<288x12xf32> to vector<256x12xf32>
    %c0_3 = arith.constant 0 : index
    %c0_4 = arith.constant 0 : index
    %c0_5 = arith.constant 0 : index
    %3 = vector.load %arg2[%c0_3, %c0_4, %c0_5] : memref<3x12x128xf32, #tpu.memory_space<vmem>>, vector<1x12x128xf32>
    %4 = vector.shape_cast %3 : vector<1x12x128xf32> to vector<12x128xf32>
    %cst = arith.constant dense<0.000000e+00> : vector<256x128xf32>
    %5 = tpu.matmul %2, %4, %cst {dimension_numbers = #tpu.dot_dimension_numbers<[1], [0], [0], [1], [0, 0, 1, 1], [], []>} : vector<256x12xf32>, vector<12x128xf32>, vector<256x128xf32> -> vector<256x128xf32>
    %6 = vector.extract_strided_slice %1 {offsets = [16, 0], sizes = [256, 12], strides = [1, 1]} : vector<288x12xf32> to vector<256x12xf32>
    %c1 = arith.constant 1 : index
    %c0_6 = arith.constant 0 : index
    %c0_7 = arith.constant 0 : index
    %7 = vector.load %arg2[%c1, %c0_6, %c0_7] : memref<3x12x128xf32, #tpu.memory_space<vmem>>, vector<1x12x128xf32>
    %8 = vector.shape_cast %7 : vector<1x12x128xf32> to vector<12x128xf32>
    %cst_8 = arith.constant dense<0.000000e+00> : vector<256x128xf32>
    %9 = tpu.matmul %6, %8, %cst_8 {dimension_numbers = #tpu.dot_dimension_numbers<[1], [0], [0], [1], [0, 0, 1, 1], [], []>} : vector<256x12xf32>, vector<12x128xf32>, vector<256x128xf32> -> vector<256x128xf32>
    %10 = arith.addf %5, %9 : vector<256x128xf32>
    %11 = vector.extract_strided_slice %1 {offsets = [32, 0], sizes = [256, 12], strides = [1, 1]} : vector<288x12xf32> to vector<256x12xf32>
    %c2 = arith.constant 2 : index
    %c0_9 = arith.constant 0 : index
    %c0_10 = arith.constant 0 : index
    %12 = vector.load %arg2[%c2, %c0_9, %c0_10] : memref<3x12x128xf32, #tpu.memory_space<vmem>>, vector<1x12x128xf32>
    %13 = vector.shape_cast %12 : vector<1x12x128xf32> to vector<12x128xf32>
    %cst_11 = arith.constant dense<0.000000e+00> : vector<256x128xf32>
    %14 = tpu.matmul %11, %13, %cst_11 {dimension_numbers = #tpu.dot_dimension_numbers<[1], [0], [0], [1], [0, 0, 1, 1], [], []>} : vector<256x12xf32>, vector<12x128xf32>, vector<256x128xf32> -> vector<256x128xf32>
    %15 = arith.addf %10, %14 : vector<256x128xf32>
    %c0_12 = arith.constant 0 : index
    %c0_13 = arith.constant 0 : index
    %16 = vector.load %arg3[%c0_12, %c0_13] : memref<1x128xf32, #tpu.memory_space<vmem>>, vector<1x128xf32>
    %17 = vector.broadcast %16 : vector<1x128xf32> to vector<256x128xf32>
    %18 = arith.mulf %15, %17 : vector<256x128xf32>
    %c0_14 = arith.constant 0 : index
    %c0_15 = arith.constant 0 : index
    %19 = vector.load %arg4[%c0_14, %c0_15] : memref<1x128xf32, #tpu.memory_space<vmem>>, vector<1x128xf32>
    %20 = vector.broadcast %19 : vector<1x128xf32> to vector<256x128xf32>
    %21 = arith.addf %18, %20 : vector<256x128xf32>
    %cst_16 = arith.constant 0.000000e+00 : f32
    %22 = vector.broadcast %cst_16 : f32 to vector<256x128xf32>
    %23 = arith.maximumf %21, %22 : vector<256x128xf32>
    %24 = vector.shape_cast %23 : vector<256x128xf32> to vector<8x2x16x128xf32>
    %c0_17 = arith.constant 0 : index
    %c0_18 = arith.constant 0 : index
    %c0_19 = arith.constant 0 : index
    %c0_20 = arith.constant 0 : index
    %25 = vector.load %arg6[%c0_17, %c0_18, %c0_19, %c0_20] : memref<8x2x16x128xf32, #tpu.memory_space<vmem>>, vector<8x2x16x128xf32>
    tpu.vector_store %arg6[%c0_17, %c0_18, %c0_19, %c0_20], %24 {strides = array<i32>} : memref<8x2x16x128xf32, #tpu.memory_space<vmem>>, vector<8x2x16x128xf32>,
    %c0_21 = arith.constant 0 : index
    %c0_22 = arith.constant 0 : index
    %c0_23 = arith.constant 0 : index
    %c0_24 = arith.constant 0 : index
    %26 = tpu.strided_load %arg6[%c0_21, %c0_22, %c0_23, %c0_24] {strides = array<i32: 1, 1, 2, 1>} : memref<8x2x16x128xf32, #tpu.memory_space<vmem>>, vector<8x2x8x128xf32>
    %c0_25 = arith.constant 0 : index
    %c0_26 = arith.constant 0 : index
    %c1_27 = arith.constant 1 : index
    %c0_28 = arith.constant 0 : index
    %27 = tpu.strided_load %arg6[%c0_25, %c0_26, %c1_27, %c0_28] {strides = array<i32: 1, 1, 2, 1>} : memref<8x2x16x128xf32, #tpu.memory_space<vmem>>, vector<8x2x8x128xf32>
    %28 = arith.maximumf %26, %27 : vector<8x2x8x128xf32>
    %29 = vector.extract_strided_slice %28 {offsets = [0, 0, 0, 0], sizes = [8, 1, 8, 128], strides = [1, 1, 1, 1]} : vector<8x2x8x128xf32> to vector<8x1x8x128xf32>
    %30 = vector.shape_cast %29 : vector<8x1x8x128xf32> to vector<8x8x128xf32>
    %31 = vector.extract_strided_slice %28 {offsets = [0, 1, 0, 0], sizes = [8, 1, 8, 128], strides = [1, 1, 1, 1]} : vector<8x2x8x128xf32> to vector<8x1x8x128xf32>
    %32 = vector.shape_cast %31 : vector<8x1x8x128xf32> to vector<8x8x128xf32>
    %33 = arith.maximumf %30, %32 : vector<8x8x128xf32>
    %c0_29 = arith.constant 0 : index
    %c0_30 = arith.constant 0 : index
    %c0_31 = arith.constant 0 : index
    %34 = vector.load %arg5[%c0_29, %c0_30, %c0_31] : memref<8x8x128xf32, #tpu.memory_space<vmem>>, vector<8x8x128xf32>
    tpu.vector_store %arg5[%c0_29, %c0_30, %c0_31], %33 {strides = array<i32>} : memref<8x8x128xf32, #tpu.memory_space<vmem>>, vector<8x8x128xf32>,
    return
  }
  func.func @transform_0(%arg0: i32) -> (i32, i32, i32, i32) {
    %c0_i32 = arith.constant 0 : i32
    %c0_i32_0 = arith.constant 0 : i32
    %c0_i32_1 = arith.constant 0 : i32
    %c0_i32_2 = arith.constant 0 : i32
    return %arg0, %c0_i32, %c0_i32_0, %c0_i32_1 : i32, i32, i32, i32
  }
  func.func @transform_1(%arg0: i32) -> (i32, i32, i32) {
    %c0_i32 = arith.constant 0 : i32
    %c0_i32_0 = arith.constant 0 : i32
    %c0_i32_1 = arith.constant 0 : i32
    %c0_i32_2 = arith.constant 0 : i32
    return %c0_i32, %c0_i32_0, %c0_i32_1 : i32, i32, i32
  }
  func.func @transform_2(%arg0: i32) -> (i32, i32) {
    %c0_i32 = arith.constant 0 : i32
    %c0_i32_0 = arith.constant 0 : i32
    %c0_i32_1 = arith.constant 0 : i32
    return %c0_i32, %c0_i32_0 : i32, i32
  }
  func.func @transform_3(%arg0: i32) -> (i32, i32) {
    %c0_i32 = arith.constant 0 : i32
    %c0_i32_0 = arith.constant 0 : i32
    %c0_i32_1 = arith.constant 0 : i32
    return %c0_i32, %c0_i32_0 : i32, i32
  }
  func.func @transform_4(%arg0: i32) -> (i32, i32, i32) {
    %c0_i32 = arith.constant 0 : i32
    %c0_i32_0 = arith.constant 0 : i32
    %c0_i32_1 = arith.constant 0 : i32
    return %arg0, %c0_i32, %c0_i32_0 : i32, i32, i32
  }
}

</mosaic_0001>

<llo_original>
// kernel: conv_block_forward.2
$region0: #{conv_block_forward.2}
  #allocation0 [shape = 'u32[]', space=smem, size = 0x4, offset = 0x4, fixed_abs, tag = 'smem constant byte address 0x4 - core index']
  #allocation1 [shape = 'u32[144,128]{1,0:T(1,128)}', space=vmem, size = 0x12000, scoped, tag = 'internal scratch']
  %s0 = inlined_call_operand.vmem [shape: f32[2,18,16,12], index: 0, kind: input, shape index: {}]
  %s1 = inlined_call_operand.vmem [shape: f32[3,12,128], index: 1, kind: input, shape index: {}]
  %s2 = inlined_call_operand.vmem [shape: f32[2,8,128], index: 2, kind: output, shape index: {0}]
  %s3 = inlined_call_operand.vmem [shape: f32[2,8,128], index: 3, kind: output, shape index: {1}]
  %4 = xla_tuple %s2, %s3
  %s5 = sld [smem:[#allocation0]]
  $region49: #{conv_block_forward.2} parent=0
    _
  %s7 = ssub.s32 1, %s5
  %s8 = scalar_select 0, %s7, %s5
  loop: start=0, step=1, limit=4
  $region2: #{conv_block_forward.2} parent=0 // loop_pre_header
    _
  $region3: #{conv_block_forward.2} parent=0 // loop_header
    %s10 = sphi 0, %s14
    %p11 = scmp.ge.s32.totalorder %s10, 4
    %s20 = sphi 0, %s22
    %s23 = sphi 0, %s20
    %s24 = sphi 0, %s23
    %s40 = sphi 0, %s24
    %s44 = sphi 0, %s44
    %s46 = sphi 0, %s44
    %s47 = sphi 0, %s46
    %s61 = sphi 0, %s47
    %s67 = sphi 0, %s69
    %s70 = sphi 0, %s67
    %s71 = sphi 0, %s70
    %s87 = sphi 0, %s71
    %s93 = sphi 0, %s95
    %s96 = sphi 0, %s93
    %s97 = sphi 0, %s96
    %s113 = sphi 0, %s97
  $region4: #{conv_block_forward.2} parent=0 // loop_header_branch
    %13 = sbr.rel (%p11) target = $region8
  $region5: #{conv_block_forward.2} parent=0 // loop_body
    %s15 = ssub.s32 %s10, 1
    %s16 = ssub.s32 %s10, 2
    %s17 = sadd.s32 %s10, 1
    %s18 = ssub.s32 %s10, %s17
    %p19 = scmp.eq.s32.totalorder %s18, 0
    %s21 = sadd.s32 %s20, 1
    %s22 = scalar_select %p19, %s20, %s21
    %p25 = pneg %p19
    %p26 = scmp.eq.s32.totalorder %s10, 1
    %p27 = por %p25, %p26
    %p28 = scmp.ne.s32.totalorder %s20, %s23
    %p29 = scmp.eq.s32.totalorder %s10, 0
    %p30 = por %p28, %p29
    %p31 = scmp.ne.s32.totalorder %s20, %s23
    %p32 = scmp.eq.s32.totalorder %s15, 1
    %p33 = por %p31, %p32
    %p34 = scmp.ne.s32.totalorder %s23, %s24
    %p35 = scmp.eq.s32.totalorder %s15, 0
    %p36 = por %p34, %p35
    %p37 = scmp.ne.s32.totalorder %s23, %s24
    %p38 = scmp.eq.s32.totalorder %s16, 1
    %p39 = por %p37, %p38
    %p41 = scmp.ne.s32.totalorder %s24, %s40
    %p42 = scmp.eq.s32.totalorder %s16, 0
    %p43 = por %p41, %p42
    %s45 = sadd.s32 %s44, 1
    %p48 = scmp.eq.s32.totalorder %s10, 1
    %p49 = scmp.ne.s32.totalorder %s44, %s46
    %p50 = scmp.eq.s32.totalorder %s10, 0
    %p51 = por %p49, %p50
    %p52 = scmp.ne.s32.totalorder %s44, %s46
    %p53 = scmp.eq.s32.totalorder %s15, 1
    %p54 = por %p52, %p53
    %p55 = scmp.ne.s32.totalorder %s46, %s47
    %p56 = scmp.eq.s32.totalorder %s15, 0
    %p57 = por %p55, %p56
    %p58 = scmp.ne.s32.totalorder %s46, %s47
    %p59 = scmp.eq.s32.totalorder %s16, 1
    %p60 = por %p58, %p59
    %p62 = scmp.ne.s32.totalorder %s47, %s61
    %p63 = scmp.eq.s32.totalorder %s16, 0
    %p64 = por %p62, %p63
    %s65 = ssub.s32 %s10, %s17
    %p66 = scmp.eq.s32.totalorder %s65, 0
    %s68 = sadd.s32 %s67, 1
    %s69 = scalar_select %p66, %s67, %s68
    %p72 = pneg %p66
    %p73 = scmp.eq.s32.totalorder %s10, 1
    %p74 = por %p72, %p73
    %p75 = scmp.ne.s32.totalorder %s67, %s70
    %p76 = scmp.eq.s32.totalorder %s10, 0
    %p77 = por %p75, %p76
    %p78 = scmp.ne.s32.totalorder %s67, %s70
    %p79 = scmp.eq.s32.totalorder %s15, 1
    %p80 = por %p78, %p79
    %p81 = scmp.ne.s32.totalorder %s70, %s71
    %p82 = scmp.eq.s32.totalorder %s15, 0
    %p83 = por %p81, %p82
    %p84 = scmp.ne.s32.totalorder %s70, %s71
    %p85 = scmp.eq.s32.totalorder %s16, 1
    %p86 = por %p84, %p85
    %p88 = scmp.ne.s32.totalorder %s71, %s87
    %p89 = scmp.eq.s32.totalorder %s16, 0
    %p90 = por %p88, %p89
    %s91 = ssub.s32 %s10, %s17
    %p92 = scmp.eq.s32.totalorder %s91, 0
    %s94 = sadd.s32 %s93, 1
    %s95 = scalar_select %p92, %s93, %s94
    %p98 = pneg %p92
    %p99 = scmp.eq.s32.totalorder %s10, 1
    %p100 = por %p98, %p99
    %p101 = scmp.ne.s32.totalorder %s93, %s96
    %p102 = scmp.eq.s32.totalorder %s10, 0
    %p103 = por %p101, %p102
    %p104 = scmp.ne.s32.totalorder %s93, %s96
    %p105 = scmp.eq.s32.totalorder %s15, 1
    %p106 = por %p104, %p105
    %p107 = scmp.ne.s32.totalorder %s96, %s97
    %p108 = scmp.eq.s32.totalorder %s15, 0
    %p109 = por %p107, %p108
    %p110 = scmp.ne.s32.totalorder %s96, %s97
    %p111 = scmp.eq.s32.totalorder %s16, 1
    %p112 = por %p110, %p111
    %p114 = scmp.ne.s32.totalorder %s97, %s113
    %p115 = scmp.eq.s32.totalorder %s16, 0
    %p116 = por %p114, %p115
    %p117 = scmp.le.s32.totalorder 1, %s10
    %p118 = scmp.lt.s32.totalorder %s10, 3
    %p119 = pnand %p117, %p118
    %p120 = pneg %p119
    // Predicated region
    $region9: #{conv_block_forward.2} parent=5 // pred_check
      _
    $region10: #{conv_block_forward.2} parent=5 // pred_check_branch
      %122 = sbr.rel (%p119) target = $region12
    $region11: #{conv_block_forward.2} parent=5 // pred_region
      %s123 = ssub.s32 %s10, 1
      // Predicated region
      $region13: #{conv_block_forward.2} parent=11 // pred_check
        %p124 = pneg %p57
      $region14: #{conv_block_forward.2} parent=11 // pred_check_branch
        %126 = sbr.rel (%p124) target = $region16
      $region15: #{conv_block_forward.2} parent=11 // pred_region
        _
      $region16: #{conv_block_forward.2} parent=11 // pred_fallthru
        _
    $region12: #{conv_block_forward.2} parent=5 // pred_fallthru
      _
    %p127 = scmp.lt.s32.totalorder %s10, 2
    // Predicated region
    $region17: #{conv_block_forward.2} parent=5 // pred_check
      %p128 = pneg %p127
    $region18: #{conv_block_forward.2} parent=5 // pred_check_branch
      %130 = sbr.rel (%p128) target = $region20
    $region19: #{conv_block_forward.2} parent=5 // pred_region
      // Predicated region
      $region21: #{conv_block_forward.2} parent=19 // pred_check
        %p131 = pneg %p30
      $region22: #{conv_block_forward.2} parent=19 // pred_check_branch
        %133 = sbr.rel (%p131) target = $region24
      $region23: #{conv_block_forward.2} parent=19 // pred_region
        %p134 = scmp.lt.s32.totalorder %s10, 1
        %s135 = scalar_select %p134, %s10, 1
        %s136 = smul.addr %s135, 36
        %s137 = smul.addr %s136, 8
        %s138 = scalar_lea.vmem %s0, %s137
      $region24: #{conv_block_forward.2} parent=19 // pred_fallthru
        _
    $region20: #{conv_block_forward.2} parent=5 // pred_fallthru
      _
    %p139 = scmp.le.s32.totalorder 1, %s10
    %p140 = scmp.lt.s32.totalorder %s10, 3
    %p141 = pnand %p139, %p140
    %p142 = pneg %p141
    // Predicated region
    $region25: #{conv_block_forward.2} parent=5 // pred_check
      _
    $region26: #{conv_block_forward.2} parent=5 // pred_check_branch
      %144 = sbr.rel (%p141) target = $region28
    $region27: #{conv_block_forward.2} parent=5 // pred_region
      %s145 = ssub.s32 %s10, 1
      %p146 = scmp.lt.s32.totalorder %s15, 1
      %s147 = scalar_select %p146, %s15, 1
      %s148 = smul.addr %s147, 36
      %s149 = smul.addr %s148, 8
      %s150 = scalar_lea.vmem %s0, %s149
      %p151 = pneg %p36
      %p152 = pneg %p33
      %p153 = pneg %p57
      %p154 = pneg %p54
      %p155 = pneg %p83
      %p156 = pneg %p80
      %p157 = scmp.lt.s32.totalorder %s15, 1
      %s158 = scalar_select %p157, %s15, 1
      %s159 = smul.addr %s158, 8
      %s160 = scalar_lea.vmem %s2, %s159
      %p161 = pneg %p109
      %p162 = pneg %p106
      %p163 = scmp.lt.s32.totalorder %s15, 1
      %s164 = scalar_select %p163, %s15, 1
      %s165 = smul.addr %s164, 8
      %s166 = scalar_lea.vmem %s3, %s165
      %p167 = scmp.lt.s32.totalorder %s15, 1
      %s168 = scalar_select %p167, %s15, 1
      %s169 = smul.addr %s168, 36
      %s170 = smul.addr %s169, 8
      %s171 = scalar_lea.vmem %s0, %s170
      %p172 = scmp.lt.s32.totalorder %s15, 1
      %s173 = scalar_select %p172, %s15, 1
      %s174 = smul.addr %s173, 8
      %s175 = scalar_lea.vmem %s2, %s174
      %p176 = scmp.lt.s32.totalorder %s15, 1
      %s177 = scalar_select %p176, %s15, 1
      %s178 = smul.addr %s177, 8
      %s179 = scalar_lea.vmem %s3, %s178
      %v180 = vld [vmem:[%s171] sm:$0xff]
      %v181 = vld [vmem:[%s171 + $0x8] sm:$0xff]
      %v182 = vld [vmem:[%s171 + $0x10] sm:$0xff]
      %v183 = vld [vmem:[%s171 + $0x18] sm:$0xff]
      %v184 = vld [vmem:[%s171 + $0x20] sm:$0xff]
      %v185 = vld [vmem:[%s171 + $0x28] sm:$0xff]
      %v186 = vld [vmem:[%s171 + $0x30] sm:$0xff]
      %v187 = vld [vmem:[%s171 + $0x38] sm:$0xff]
      %v188 = vld [vmem:[%s171 + $0x40] sm:$0xff]
      %v189 = vld [vmem:[%s171 + $0x48] sm:$0xff]
      %v190 = vld [vmem:[%s171 + $0x50] sm:$0xff]
      %v191 = vld [vmem:[%s171 + $0x58] sm:$0xff]
      %v192 = vld [vmem:[%s171 + $0x60] sm:$0xff]
      %v193 = vld [vmem:[%s171 + $0x68] sm:$0xff]
      %v194 = vld [vmem:[%s171 + $0x70] sm:$0xff]
      %v195 = vld [vmem:[%s171 + $0x78] sm:$0xff]
      %v196 = vld [vmem:[%s171 + $0x80] sm:$0xff]
      %v197 = vld [vmem:[%s171 + $0x88] sm:$0xff]
      %v198 = vld [vmem:[%s171 + $0x90] sm:$0xff]
      %v199 = vld [vmem:[%s171 + $0x98] sm:$0xff]
      %v200 = vld [vmem:[%s171 + $0xa0] sm:$0xff]
      %v201 = vld [vmem:[%s171 + $0xa8] sm:$0xff]
      %v202 = vld [vmem:[%s171 + $0xb0] sm:$0xff]
      %v203 = vld [vmem:[%s171 + $0xb8] sm:$0xff]
      %v204 = vld [vmem:[%s171 + $0xc0] sm:$0xff]
      %v205 = vld [vmem:[%s171 + $0xc8] sm:$0xff]
      %v206 = vld [vmem:[%s171 + $0xd0] sm:$0xff]
      %v207 = vld [vmem:[%s171 + $0xd8] sm:$0xff]
      %v208 = vld [vmem:[%s171 + $0xe0] sm:$0xff]
      %v209 = vld [vmem:[%s171 + $0xe8] sm:$0xff]
      %v210 = vld [vmem:[%s171 + $0xf0] sm:$0xff]
      %v211 = vld [vmem:[%s171 + $0xf8] sm:$0xff]
      %v212 = vld [vmem:[%s171 + $0x100] sm:$0xff]
      %v213 = vld [vmem:[%s171 + $0x108] sm:$0xff]
      %v214 = vld [vmem:[%s171 + $0x110] sm:$0xff]
      %v215 = vld [vmem:[%s171 + $0x118] sm:$0xff]
      %v216 = vld [vmem:[%s1] sm:$0xff]
      %v217 = vld [vmem:[%s1 + $0x8] sm:$0xf]
      %s218 = scalar_lea.vmem %s1, 16
      %v219 = vld [vmem:[%s218] sm:$0xff]
      %v220 = vld [vmem:[%s218 + $0x8] sm:$0xf]
      %vm221 = vcmask 97280
      %v223 = vsel %vm221, %v182, 0
      %v226 = vsel %vm221, %v183, 0
      %v229 = vsel %vm221, %v184, 0
      %v232 = vsel %vm221, %v185, 0
      %v235 = vsel %vm221, %v186, 0
      %v238 = vsel %vm221, %v187, 0
      %v241 = vsel %vm221, %v188, 0
      %v244 = vsel %vm221, %v189, 0
      %v247 = vsel %vm221, %v190, 0
      %v250 = vsel %vm221, %v191, 0
      %v253 = vsel %vm221, %v192, 0
      %v256 = vsel %vm221, %v193, 0
      %v259 = vsel %vm221, %v194, 0
      %v262 = vsel %vm221, %v195, 0
      %v265 = vsel %vm221, %v196, 0
      %v268 = vsel %vm221, %v197, 0
      %v271 = vsel %vm221, %v198, 0
      %v274 = vsel %vm221, %v199, 0
      %v277 = vsel %vm221, %v200, 0
      %v280 = vsel %vm221, %v201, 0
      %v283 = vsel %vm221, %v202, 0
      %v286 = vsel %vm221, %v203, 0
      %v289 = vsel %vm221, %v204, 0
      %v292 = vsel %vm221, %v205, 0
      %v295 = vsel %vm221, %v206, 0
      %v298 = vsel %vm221, %v207, 0
      %v301 = vsel %vm221, %v208, 0
      %v304 = vsel %vm221, %v209, 0
      %v307 = vsel %vm221, %v210, 0
      %v310 = vsel %vm221, %v211, 0
      %v313 = vsel %vm221, %v212, 0
      %v316 = vsel %vm221, %v213, 0
      %vm318 = vcmask 1043456
      %v320 = vsel %vm318, %v220, 0
      %322 = vmatprep.subr.mxu0 0.0
      %323 = vmatpush1.msra.mxu0 %v219
      %324 = vmatprep.subr.mxu0 0.0
      %325 = vmatpush1.msra.mxu0 %v320
      %326 = vmatprep.subr.mxu0 0.0
      %327 = vmatpush1.msra.mxu0 0.0
      %328 = vmatprep.subr.mxu0 0.0
      %329 = vmatpush1.msra.mxu0 0.0
      %330 = vmatprep.subr.mxu0 0.0
      %331 = vmatpush1.msra.mxu0 0.0
      %332 = vmatprep.subr.mxu0 0.0
      %333 = vmatpush1.msra.mxu0 0.0
      %334 = vmatprep.subr.mxu0 0.0
      %335 = vmatpush1.msra.mxu0 0.0
      %336 = vmatprep.subr.mxu0 0.0
      %337 = vmatpush1.msra.mxu0 0.0
      %338 = vmatprep.subr.mxu0 0.0
      %339 = vmatpush1.msra.mxu0 0.0
      %340 = vmatprep.subr.mxu0 0.0
      %341 = vmatpush1.msra.mxu0 0.0
      %342 = vmatprep.subr.mxu0 0.0
      %343 = vmatpush1.msra.mxu0 0.0
      %344 = vmatprep.subr.mxu0 0.0
      %345 = vmatpush1.msra.mxu0 0.0
      %346 = vmatprep.subr.mxu0 0.0
      %347 = vmatpush1.msra.mxu0 0.0
      %348 = vmatprep.subr.mxu0 0.0
      %349 = vmatpush1.msra.mxu0 0.0
      %350 = vmatprep.subr.mxu0 0.0
      %351 = vmatpush1.msra.mxu0 0.0
      %352 = vmatprep.subr.mxu0 0.0
      %353 = vmatpush1.msra.mxu0 0.0
      %354 = vmatprep.subr.mxu0 0.0
      %355 = vmatpush1.msra.mxu0 0.0
      %356 = vmatprep.subr.mxu0 0.0
      %357 = vmatpush1.msra.mxu0 0.0
      %358 = vmatprep.subr.mxu0 0.0
      %359 = vmatpush1.msra.mxu0 0.0
      %360 = vmatprep.subr.mxu0 0.0
      %361 = vmatpush1.msra.mxu0 0.0
      %362 = vmatprep.subr.mxu0 0.0
      %363 = vmatpush1.msra.mxu0 0.0
      %364 = vmatprep.subr.mxu0 0.0
      %365 = vmatpush1.msra.mxu0 0.0
      %366 = vmatprep.subr.mxu0 0.0
      %367 = vmatpush1.msra.mxu0 0.0
      %368 = vmatprep.subr.mxu0 0.0
      %369 = vmatpush1.msra.mxu0 0.0
      %370 = vmatprep.subr.mxu0 0.0
      %371 = vmatpush1.msra.mxu0 0.0
      %372 = vmatprep.subr.mxu0 0.0
      %373 = vmatpush1.msra.mxu0 0.0
      %374 = vmatprep.subr.mxu0 0.0
      %375 = vmatpush1.msra.mxu0 0.0
      %376 = vmatprep.subr.mxu0 0.0
      %377 = vmatpush1.msra.mxu0 0.0
      %378 = vmatprep.subr.mxu0 0.0
      %379 = vmatpush1.msra.mxu0 0.0
      %380 = vmatprep.subr.mxu0 0.0
      %381 = vmatpush1.msra.mxu0 0.0
      %382 = vmatprep.subr.mxu0 0.0
      %383 = vmatpush1.msra.mxu0 0.0
      %384 = vmatprep.subr.mxu0 0.0
      %385 = vmatpush1.msra.mxu0 0.0
      %386 = vmatprep.mubr.f32.mxu0 0.0
      %387 = vmatmul.mubr.f32.gmra.mrb[0].mxu0 %v223
      %v388 = vpop.f32.mrb[0].mxu0
      %v389 = vadd.f32 0.0, %v388
      %v390 = vpop.f32.mrb[0].mxu0
      %391 = vmatprep.mubr.f32.mxu0 0.0
      %392 = vmatmul.mubr.f32.gmra.mrb[0].mxu0 %v226
      %v393 = vpop.f32.mrb[0].mxu0
      %v394 = vadd.f32 0.0, %v393
      %v395 = vpop.f32.mrb[0].mxu0
      %396 = vmatprep.mubr.f32.mxu0 0.0
      %397 = vmatmul.mubr.f32.gmra.mrb[0].mxu0 %v229
      %v398 = vpop.f32.mrb[0].mxu0
      %v399 = vadd.f32 0.0, %v398
      %v400 = vpop.f32.mrb[0].mxu0
      %401 = vmatprep.mubr.f32.mxu0 0.0
      %402 = vmatmul.mubr.f32.gmra.mrb[0].mxu0 %v232
      %v403 = vpop.f32.mrb[0].mxu0
      %v404 = vadd.f32 0.0, %v403
      %v405 = vpop.f32.mrb[0].mxu0
      %406 = vmatprep.mubr.f32.mxu0 0.0
      %407 = vmatmul.mubr.f32.gmra.mrb[0].mxu0 %v235
      %v408 = vpop.f32.mrb[0].mxu0
      %v409 = vadd.f32 0.0, %v408
      %v410 = vpop.f32.mrb[0].mxu0
      %411 = vmatprep.mubr.f32.mxu0 0.0
      %412 = vmatmul.mubr.f32.gmra.mrb[0].mxu0 %v238
      %v413 = vpop.f32.mrb[0].mxu0
      %v414 = vadd.f32 0.0, %v413
      %v415 = vpop.f32.mrb[0].mxu0
      %416 = vmatprep.mubr.f32.mxu0 0.0
      %417 = vmatmul.mubr.f32.gmra.mrb[0].mxu0 %v241
      %v418 = vpop.f32.mrb[0].mxu0
      %v419 = vadd.f32 0.0, %v418
      %v420 = vpop.f32.mrb[0].mxu0
      %421 = vmatprep.mubr.f32.mxu0 0.0
      %422 = vmatmul.mubr.f32.gmra.mrb[0].mxu0 %v244
      %v423 = vpop.f32.mrb[0].mxu0
      %v424 = vadd.f32 0.0, %v423
      %v425 = vpop.f32.mrb[0].mxu0
      %426 = vmatprep.mubr.f32.mxu0 0.0
      %427 = vmatmul.mubr.f32.gmra.mrb[0].mxu0 %v247
      %v428 = vpop.f32.mrb[0].mxu0
      %v429 = vadd.f32 0.0, %v428
      %v430 = vpop.f32.mrb[0].mxu0
      %431 = vmatprep.mubr.f32.mxu0 0.0
      %432 = vmatmul.mubr.f32.gmra.mrb[0].mxu0 %v250
      %v433 = vpop.f32.mrb[0].mxu0
      %v434 = vadd.f32 0.0, %v433
      %v435 = vpop.f32.mrb[0].mxu0
      %436 = vmatprep.mubr.f32.mxu0 0.0
      %437 = vmatmul.mubr.f32.gmra.mrb[0].mxu0 %v253
      %v438 = vpop.f32.mrb[0].mxu0
      %v439 = vadd.f32 0.0, %v438
      %v440 = vpop.f32.mrb[0].mxu0
      %441 = vmatprep.mubr.f32.mxu0 0.0
      %442 = vmatmul.mubr.f32.gmra.mrb[0].mxu0 %v256
      %v443 = vpop.f32.mrb[0].mxu0
      %v444 = vadd.f32 0.0, %v443
      %v445 = vpop.f32.mrb[0].mxu0
      %446 = vmatprep.mubr.f32.mxu0 0.0
      %447 = vmatmul.mubr.f32.gmra.mrb[0].mxu0 %v259
      %v448 = vpop.f32.mrb[0].mxu0
      %v449 = vadd.f32 0.0, %v448
      %v450 = vpop.f32.mrb[0].mxu0
      %451 = vmatprep.mubr.f32.mxu0 0.0
      %452 = vmatmul.mubr.f32.gmra.mrb[0].mxu0 %v262
      %v453 = vpop.f32.mrb[0].mxu0
      %v454 = vadd.f32 0.0, %v453
      %v455 = vpop.f32.mrb[0].mxu0
      %456 = vmatprep.mubr.f32.mxu0 0.0
      %457 = vmatmul.mubr.f32.gmra.mrb[0].mxu0 %v265
      %v458 = vpop.f32.mrb[0].mxu0
      %v459 = vadd.f32 0.0, %v458
      %v460 = vpop.f32.mrb[0].mxu0
      %461 = vmatprep.mubr.f32.mxu0 0.0
      %462 = vmatmul.mubr.f32.gmra.mrb[0].mxu0 %v268
      %v463 = vpop.f32.mrb[0].mxu0
      %v464 = vadd.f32 0.0, %v463
      %v465 = vpop.f32.mrb[0].mxu0
      %466 = vmatprep.mubr.f32.mxu0 0.0
      %467 = vmatmul.mubr.f32.gmra.mrb[0].mxu0 %v271
      %v468 = vpop.f32.mrb[0].mxu0
      %v469 = vadd.f32 0.0, %v468
      %v470 = vpop.f32.mrb[0].mxu0
      %471 = vmatprep.mubr.f32.mxu0 0.0
      %472 = vmatmul.mubr.f32.gmra.mrb[0].mxu0 %v274
      %v473 = vpop.f32.mrb[0].mxu0
      %v474 = vadd.f32 0.0, %v473
      %v475 = vpop.f32.mrb[0].mxu0
      %476 = vmatprep.mubr.f32.mxu0 0.0
      %477 = vmatmul.mubr.f32.gmra.mrb[0].mxu0 %v277
      %v478 = vpop.f32.mrb[0].mxu0
      %v479 = vadd.f32 0.0, %v478
      %v480 = vpop.f32.mrb[0].mxu0
      %481 = vmatprep.mubr.f32.mxu0 0.0
      %482 = vmatmul.mubr.f32.gmra.mrb[0].mxu0 %v280
      %v483 = vpop.f32.mrb[0].mxu0
      %v484 = vadd.f32 0.0, %v483
      %v485 = vpop.f32.mrb[0].mxu0
      %486 = vmatprep.mubr.f32.mxu0 0.0
      %487 = vmatmul.mubr.f32.gmra.mrb[0].mxu0 %v283
      %v488 = vpop.f32.mrb[0].mxu0
      %v489 = vadd.f32 0.0, %v488
      %v490 = vpop.f32.mrb[0].mxu0
      %491 = vmatprep.mubr.f32.mxu0 0.0
      %492 = vmatmul.mubr.f32.gmra.mrb[0].mxu0 %v286
      %v493 = vpop.f32.mrb[0].mxu0
      %v494 = vadd.f32 0.0, %v493
      %v495 = vpop.f32.mrb[0].mxu0
      %496 = vmatprep.mubr.f32.mxu0 0.0
      %497 = vmatmul.mubr.f32.gmra.mrb[0].mxu0 %v289
      %v498 = vpop.f32.mrb[0].mxu0
      %v499 = vadd.f32 0.0, %v498
      %v500 = vpop.f32.mrb[0].mxu0
      %501 = vmatprep.mubr.f32.mxu0 0.0
      %502 = vmatmul.mubr.f32.gmra.mrb[0].mxu0 %v292
      %v503 = vpop.f32.mrb[0].mxu0
      %v504 = vadd.f32 0.0, %v503
      %v505 = vpop.f32.mrb[0].mxu0
      %506 = vmatprep.mubr.f32.mxu0 0.0
      %507 = vmatmul.mubr.f32.gmra.mrb[0].mxu0 %v295
      %v508 = vpop.f32.mrb[0].mxu0
      %v509 = vadd.f32 0.0, %v508
      %v510 = vpop.f32.mrb[0].mxu0
      %511 = vmatprep.mubr.f32.mxu0 0.0
      %512 = vmatmul.mubr.f32.gmra.mrb[0].mxu0 %v298
      %v513 = vpop.f32.mrb[0].mxu0
      %v514 = vadd.f32 0.0, %v513
      %v515 = vpop.f32.mrb[0].mxu0
      %516 = vmatprep.mubr.f32.mxu0 0.0
      %517 = vmatmul.mubr.f32.gmra.mrb[0].mxu0 %v301
      %v518 = vpop.f32.mrb[0].mxu0
      %v519 = vadd.f32 0.0, %v518
      %v520 = vpop.f32.mrb[0].mxu0
      %521 = vmatprep.mubr.f32.mxu0 0.0
      %522 = vmatmul.mubr.f32.gmra.mrb[0].mxu0 %v304
      %v523 = vpop.f32.mrb[0].mxu0
      %v524 = vadd.f32 0.0, %v523
      %v525 = vpop.f32.mrb[0].mxu0
      %526 = vmatprep.mubr.f32.mxu0 0.0
      %527 = vmatmul.mubr.f32.gmra.mrb[0].mxu0 %v307
      %v528 = vpop.f32.mrb[0].mxu0
      %v529 = vadd.f32 0.0, %v528
      %v530 = vpop.f32.mrb[0].mxu0
      %531 = vmatprep.mubr.f32.mxu0 0.0
      %532 = vmatmul.mubr.f32.gmra.mrb[0].mxu0 %v310
      %v533 = vpop.f32.mrb[0].mxu0
      %v534 = vadd.f32 0.0, %v533
      %v535 = vpop.f32.mrb[0].mxu0
      %536 = vmatprep.mubr.f32.mxu0 0.0
      %537 = vmatmul.mubr.f32.gmra.mrb[0].mxu0 %v313
      %v538 = vpop.f32.mrb[0].mxu0
      %v539 = vadd.f32 0.0, %v538
      %v540 = vpop.f32.mrb[0].mxu0
      %541 = vmatprep.mubr.f32.mxu0 0.0
      %542 = vmatmul.mubr.f32.gmra.mrb[0].mxu0 %v316
      %v543 = vpop.f32.mrb[0].mxu0
      %v544 = vadd.f32 0.0, %v543
      %v545 = vpop.f32.mrb[0].mxu0
      %546 = vdwg.mxu0
      %v548 = vsel %vm221, %v180, 0
      %v551 = vsel %vm221, %v181, 0
      %v554 = vsel %vm318, %v217, 0
      %556 = vmatprep.subr.mxu0 0.0
      %557 = vmatpush1.msra.mxu0 %v216
      %558 = vmatprep.subr.mxu0 0.0
      %559 = vmatpush1.msra.mxu0 %v554
      %560 = vmatprep.subr.mxu0 0.0
      %561 = vmatpush1.msra.mxu0 0.0
      %562 = vmatprep.subr.mxu0 0.0
      %563 = vmatpush1.msra.mxu0 0.0
      %564 = vmatprep.subr.mxu0 0.0
      %565 = vmatpush1.msra.mxu0 0.0
      %566 = vmatprep.subr.mxu0 0.0
      %567 = vmatpush1.msra.mxu0 0.0
      %568 = vmatprep.subr.mxu0 0.0
      %569 = vmatpush1.msra.mxu0 0.0
      %570 = vmatprep.subr.mxu0 0.0
      %571 = vmatpush1.msra.mxu0 0.0
      %572 = vmatprep.subr.mxu0 0.0
      %573 = vmatpush1.msra.mxu0 0.0
      %574 = vmatprep.subr.mxu0 0.0
      %575 = vmatpush1.msra.mxu0 0.0
      %576 = vmatprep.subr.mxu0 0.0
      %577 = vmatpush1.msra.mxu0 0.0
      %578 = vmatprep.subr.mxu0 0.0
      %579 = vmatpush1.msra.mxu0 0.0
      %580 = vmatprep.subr.mxu0 0.0
      %581 = vmatpush1.msra.mxu0 0.0
      %582 = vmatprep.subr.mxu0 0.0
      %583 = vmatpush1.msra.mxu0 0.0
      %584 = vmatprep.subr.mxu0 0.0
      %585 = vmatpush1.msra.mxu0 0.0
      %586 = vmatprep.subr.mxu0 0.0
      %587 = vmatpush1.msra.mxu0 0.0
      %588 = vmatprep.subr.mxu0 0.0
      %589 = vmatpush1.msra.mxu0 0.0
      %590 = vmatprep.subr.mxu0 0.0
      %591 = vmatpush1.msra.mxu0 0.0
      %592 = vmatprep.subr.mxu0 0.0
      %593 = vmatpush1.msra.mxu0 0.0
      %594 = vmatprep.subr.mxu0 0.0
      %595 = vmatpush1.msra.mxu0 0.0
      %596 = vmatprep.subr.mxu0 0.0
      %597 = vmatpush1.msra.mxu0 0.0
      %598 = vmatprep.subr.mxu0 0.0
      %599 = vmatpush1.msra.mxu0 0.0
      %600 = vmatprep.subr.mxu0 0.0
      %601 = vmatpush1.msra.mxu0 0.0
      %602 = vmatprep.subr.mxu0 0.0
      %603 = vmatpush1.msra.mxu0 0.0
      %604 = vmatprep.subr.mxu0 0.0
      %605 = vmatpush1.msra.mxu0 0.0
      %606 = vmatprep.subr.mxu0 0.0
      %607 = vmatpush1.msra.mxu0 0.0
      %608 = vmatprep.subr.mxu0 0.0
      %609 = vmatpush1.msra.mxu0 0.0
      %610 = vmatprep.subr.mxu0 0.0
      %611 = vmatpush1.msra.mxu0 0.0
      %612 = vmatprep.subr.mxu0 0.0
      %613 = vmatpush1.msra.mxu0 0.0
      %614 = vmatprep.subr.mxu0 0.0
      %615 = vmatpush1.msra.mxu0 0.0
      %616 = vmatprep.subr.mxu0 0.0
      %617 = vmatpush1.msra.mxu0 0.0
      %618 = vmatprep.subr.mxu0 0.0
      %619 = vmatpush1.msra.mxu0 0.0
      %620 = vmatprep.mubr.f32.mxu0 0.0
      %621 = vmatmul.mubr.f32.gmra.mrb[0].mxu0 %v548
      %v622 = vpop.f32.mrb[0].mxu0
      %v623 = vadd.f32 %v389, %v622
      %v624 = vpop.f32.mrb[0].mxu0
      %625 = vmatprep.mubr.f32.mxu0 0.0
      %626 = vmatmul.mubr.f32.gmra.mrb[0].mxu0 %v551
      %v627 = vpop.f32.mrb[0].mxu0
      %v628 = vadd.f32 %v394, %v627
      %v629 = vpop.f32.mrb[0].mxu0
      %630 = vmatprep.mubr.f32.mxu0 0.0
      %631 = vmatmul.mubr.f32.gmra.mrb[0].mxu0 %v223
      %v632 = vpop.f32.mrb[0].mxu0
      %v633 = vadd.f32 %v399, %v632
      %v634 = vpop.f32.mrb[0].mxu0
      %635 = vmatprep.mubr.f32.mxu0 0.0
      %636 = vmatmul.mubr.f32.gmra.mrb[0].mxu0 %v226
      %v637 = vpop.f32.mrb[0].mxu0
      %v638 = vadd.f32 %v404, %v637
      %v639 = vpop.f32.mrb[0].mxu0
      %640 = vmatprep.mubr.f32.mxu0 0.0
      %641 = vmatmul.mubr.f32.gmra.mrb[0].mxu0 %v229
      %v642 = vpop.f32.mrb[0].mxu0
      %v643 = vadd.f32 %v409, %v642
      %v644 = vpop.f32.mrb[0].mxu0
      %645 = vmatprep.mubr.f32.mxu0 0.0
      %646 = vmatmul.mubr.f32.gmra.mrb[0].mxu0 %v232
      %v647 = vpop.f32.mrb[0].mxu0
      %v648 = vadd.f32 %v414, %v647
      %v649 = vpop.f32.mrb[0].mxu0
      %650 = vmatprep.mubr.f32.mxu0 0.0
      %651 = vmatmul.mubr.f32.gmra.mrb[0].mxu0 %v235
      %v652 = vpop.f32.mrb[0].mxu0
      %v653 = vadd.f32 %v419, %v652
      %v654 = vpop.f32.mrb[0].mxu0
      %655 = vmatprep.mubr.f32.mxu0 0.0
      %656 = vmatmul.mubr.f32.gmra.mrb[0].mxu0 %v238
      %v657 = vpop.f32.mrb[0].mxu0
      %v658 = vadd.f32 %v424, %v657
      %v659 = vpop.f32.mrb[0].mxu0
      %660 = vmatprep.mubr.f32.mxu0 0.0
      %661 = vmatmul.mubr.f32.gmra.mrb[0].mxu0 %v241
      %v662 = vpop.f32.mrb[0].mxu0
      %v663 = vadd.f32 %v429, %v662
      %v664 = vpop.f32.mrb[0].mxu0
      %665 = vmatprep.mubr.f32.mxu0 0.0
      %666 = vmatmul.mubr.f32.gmra.mrb[0].mxu0 %v244
      %v667 = vpop.f32.mrb[0].mxu0
      %v668 = vadd.f32 %v434, %v667
      %v669 = vpop.f32.mrb[0].mxu0
      %670 = vmatprep.mubr.f32.mxu0 0.0
      %671 = vmatmul.mubr.f32.gmra.mrb[0].mxu0 %v247
      %v672 = vpop.f32.mrb[0].mxu0
      %v673 = vadd.f32 %v439, %v672
      %v674 = vpop.f32.mrb[0].mxu0
      %675 = vmatprep.mubr.f32.mxu0 0.0
      %676 = vmatmul.mubr.f32.gmra.mrb[0].mxu0 %v250
      %v677 = vpop.f32.mrb[0].mxu0
      %v678 = vadd.f32 %v444, %v677
      %v679 = vpop.f32.mrb[0].mxu0
      %680 = vmatprep.mubr.f32.mxu0 0.0
      %681 = vmatmul.mubr.f32.gmra.mrb[0].mxu0 %v253
      %v682 = vpop.f32.mrb[0].mxu0
      %v683 = vadd.f32 %v449, %v682
      %v684 = vpop.f32.mrb[0].mxu0
      %685 = vmatprep.mubr.f32.mxu0 0.0
      %686 = vmatmul.mubr.f32.gmra.mrb[0].mxu0 %v256
      %v687 = vpop.f32.mrb[0].mxu0
      %v688 = vadd.f32 %v454, %v687
      %v689 = vpop.f32.mrb[0].mxu0
      %690 = vmatprep.mubr.f32.mxu0 0.0
      %691 = vmatmul.mubr.f32.gmra.mrb[0].mxu0 %v259
      %v692 = vpop.f32.mrb[0].mxu0
      %v693 = vadd.f32 %v459, %v692
      %v694 = vpop.f32.mrb[0].mxu0
      %695 = vmatprep.mubr.f32.mxu0 0.0
      %696 = vmatmul.mubr.f32.gmra.mrb[0].mxu0 %v262
      %v697 = vpop.f32.mrb[0].mxu0
      %v698 = vadd.f32 %v464, %v697
      %v699 = vpop.f32.mrb[0].mxu0
      %700 = vmatprep.mubr.f32.mxu0 0.0
      %701 = vmatmul.mubr.f32.gmra.mrb[0].mxu0 %v265
      %v702 = vpop.f32.mrb[0].mxu0
      %v703 = vadd.f32 %v469, %v702
      %v704 = vpop.f32.mrb[0].mxu0
      %705 = vmatprep.mubr.f32.mxu0 0.0
      %706 = vmatmul.mubr.f32.gmra.mrb[0].mxu0 %v268
      %v707 = vpop.f32.mrb[0].mxu0
      %v708 = vadd.f32 %v474, %v707
      %v709 = vpop.f32.mrb[0].mxu0
      %710 = vmatprep.mubr.f32.mxu0 0.0
      %711 = vmatmul.mubr.f32.gmra.mrb[0].mxu0 %v271
      %v712 = vpop.f32.mrb[0].mxu0
      %v713 = vadd.f32 %v479, %v712
      %v714 = vpop.f32.mrb[0].mxu0
      %715 = vmatprep.mubr.f32.mxu0 0.0
      %716 = vmatmul.mubr.f32.gmra.mrb[0].mxu0 %v274
      %v717 = vpop.f32.mrb[0].mxu0
      %v718 = vadd.f32 %v484, %v717
      %v719 = vpop.f32.mrb[0].mxu0
      %720 = vmatprep.mubr.f32.mxu0 0.0
      %721 = vmatmul.mubr.f32.gmra.mrb[0].mxu0 %v277
      %v722 = vpop.f32.mrb[0].mxu0
      %v723 = vadd.f32 %v489, %v722
      %v724 = vpop.f32.mrb[0].mxu0
      %725 = vmatprep.mubr.f32.mxu0 0.0
      %726 = vmatmul.mubr.f32.gmra.mrb[0].mxu0 %v280
      %v727 = vpop.f32.mrb[0].mxu0
      %v728 = vadd.f32 %v494, %v727
      %v729 = vpop.f32.mrb[0].mxu0
      %730 = vmatprep.mubr.f32.mxu0 0.0
      %731 = vmatmul.mubr.f32.gmra.mrb[0].mxu0 %v283
      %v732 = vpop.f32.mrb[0].mxu0
      %v733 = vadd.f32 %v499, %v732
      %v734 = vpop.f32.mrb[0].mxu0
      %735 = vmatprep.mubr.f32.mxu0 0.0
      %736 = vmatmul.mubr.f32.gmra.mrb[0].mxu0 %v286
      %v737 = vpop.f32.mrb[0].mxu0
      %v738 = vadd.f32 %v504, %v737
      %v739 = vpop.f32.mrb[0].mxu0
      %740 = vmatprep.mubr.f32.mxu0 0.0
      %741 = vmatmul.mubr.f32.gmra.mrb[0].mxu0 %v289
      %v742 = vpop.f32.mrb[0].mxu0
      %v743 = vadd.f32 %v509, %v742
      %v744 = vpop.f32.mrb[0].mxu0
      %745 = vmatprep.mubr.f32.mxu0 0.0
      %746 = vmatmul.mubr.f32.gmra.mrb[0].mxu0 %v292
      %v747 = vpop.f32.mrb[0].mxu0
      %v748 = vadd.f32 %v514, %v747
      %v749 = vpop.f32.mrb[0].mxu0
      %750 = vmatprep.mubr.f32.mxu0 0.0
      %751 = vmatmul.mubr.f32.gmra.mrb[0].mxu0 %v295
      %v752 = vpop.f32.mrb[0].mxu0
      %v753 = vadd.f32 %v519, %v752
      %v754 = vpop.f32.mrb[0].mxu0
      %755 = vmatprep.mubr.f32.mxu0 0.0
      %756 = vmatmul.mubr.f32.gmra.mrb[0].mxu0 %v298
      %v757 = vpop.f32.mrb[0].mxu0
      %v758 = vadd.f32 %v524, %v757
      %v759 = vpop.f32.mrb[0].mxu0
      %760 = vmatprep.mubr.f32.mxu0 0.0
      %761 = vmatmul.mubr.f32.gmra.mrb[0].mxu0 %v301
      %v762 = vpop.f32.mrb[0].mxu0
      %v763 = vadd.f32 %v529, %v762
      %v764 = vpop.f32.mrb[0].mxu0
      %765 = vmatprep.mubr.f32.mxu0 0.0
      %766 = vmatmul.mubr.f32.gmra.mrb[0].mxu0 %v304
      %v767 = vpop.f32.mrb[0].mxu0
      %v768 = vadd.f32 %v534, %v767
      %v769 = vpop.f32.mrb[0].mxu0
      %770 = vmatprep.mubr.f32.mxu0 0.0
      %771 = vmatmul.mubr.f32.gmra.mrb[0].mxu0 %v307
      %v772 = vpop.f32.mrb[0].mxu0
      %v773 = vadd.f32 %v539, %v772
      %v774 = vpop.f32.mrb[0].mxu0
      %775 = vmatprep.mubr.f32.mxu0 0.0
      %776 = vmatmul.mubr.f32.gmra.mrb[0].mxu0 %v310
      %v777 = vpop.f32.mrb[0].mxu0
      %v778 = vadd.f32 %v544, %v777
      %v779 = vpop.f32.mrb[0].mxu0
      %780 = vdwg.mxu0
      %s781 = scalar_lea.vmem %s1, 32
      %v782 = vld [vmem:[%s781] sm:$0xff]
      %v783 = vld [vmem:[%s781 + $0x8] sm:$0xf]
      %v785 = vsel %vm221, %v214, 0
      %v788 = vsel %vm221, %v215, 0
      %v791 = vsel %vm318, %v783, 0
      %793 = vmatprep.subr.mxu0 0.0
      %794 = vmatpush1.msra.mxu0 %v782
      %795 = vmatprep.subr.mxu0 0.0
      %796 = vmatpush1.msra.mxu0 %v791
      %797 = vmatprep.subr.mxu0 0.0
      %798 = vmatpush1.msra.mxu0 0.0
      %799 = vmatprep.subr.mxu0 0.0
      %800 = vmatpush1.msra.mxu0 0.0
      %801 = vmatprep.subr.mxu0 0.0
      %802 = vmatpush1.msra.mxu0 0.0
      %803 = vmatprep.subr.mxu0 0.0
      %804 = vmatpush1.msra.mxu0 0.0
      %805 = vmatprep.subr.mxu0 0.0
      %806 = vmatpush1.msra.mxu0 0.0
      %807 = vmatprep.subr.mxu0 0.0
      %808 = vmatpush1.msra.mxu0 0.0
      %809 = vmatprep.subr.mxu0 0.0
      %810 = vmatpush1.msra.mxu0 0.0
      %811 = vmatprep.subr.mxu0 0.0
      %812 = vmatpush1.msra.mxu0 0.0
      %813 = vmatprep.subr.mxu0 0.0
      %814 = vmatpush1.msra.mxu0 0.0
      %815 = vmatprep.subr.mxu0 0.0
      %816 = vmatpush1.msra.mxu0 0.0
      %817 = vmatprep.subr.mxu0 0.0
      %818 = vmatpush1.msra.mxu0 0.0
      %819 = vmatprep.subr.mxu0 0.0
      %820 = vmatpush1.msra.mxu0 0.0
      %821 = vmatprep.subr.mxu0 0.0
      %822 = vmatpush1.msra.mxu0 0.0
      %823 = vmatprep.subr.mxu0 0.0
      %824 = vmatpush1.msra.mxu0 0.0
      %825 = vmatprep.subr.mxu0 0.0
      %826 = vmatpush1.msra.mxu0 0.0
      %827 = vmatprep.subr.mxu0 0.0
      %828 = vmatpush1.msra.mxu0 0.0
      %829 = vmatprep.subr.mxu0 0.0
      %830 = vmatpush1.msra.mxu0 0.0
      %831 = vmatprep.subr.mxu0 0.0
      %832 = vmatpush1.msra.mxu0 0.0
      %833 = vmatprep.subr.mxu0 0.0
      %834 = vmatpush1.msra.mxu0 0.0
      %835 = vmatprep.subr.mxu0 0.0
      %836 = vmatpush1.msra.mxu0 0.0
      %837 = vmatprep.subr.mxu0 0.0
      %838 = vmatpush1.msra.mxu0 0.0
      %839 = vmatprep.subr.mxu0 0.0
      %840 = vmatpush1.msra.mxu0 0.0
      %841 = vmatprep.subr.mxu0 0.0
      %842 = vmatpush1.msra.mxu0 0.0
      %843 = vmatprep.subr.mxu0 0.0
      %844 = vmatpush1.msra.mxu0 0.0
      %845 = vmatprep.subr.mxu0 0.0
      %846 = vmatpush1.msra.mxu0 0.0
      %847 = vmatprep.subr.mxu0 0.0
      %848 = vmatpush1.msra.mxu0 0.0
      %849 = vmatprep.subr.mxu0 0.0
      %850 = vmatpush1.msra.mxu0 0.0
      %851 = vmatprep.subr.mxu0 0.0
      %852 = vmatpush1.msra.mxu0 0.0
      %853 = vmatprep.subr.mxu0 0.0
      %854 = vmatpush1.msra.mxu0 0.0
      %855 = vmatprep.subr.mxu0 0.0
      %856 = vmatpush1.msra.mxu0 0.0
      %857 = vmatprep.mubr.f32.mxu0 0.0
      %858 = vmatmul.mubr.f32.gmra.mrb[0].mxu0 %v229
      %v859 = vpop.f32.mrb[0].mxu0
      %v860 = vadd.f32 0.0, %v859
      %v861 = vpop.f32.mrb[0].mxu0
      %862 = vmatprep.mubr.f32.mxu0 0.0
      %863 = vmatmul.mubr.f32.gmra.mrb[0].mxu0 %v232
      %v864 = vpop.f32.mrb[0].mxu0
      %v865 = vadd.f32 0.0, %v864
      %v866 = vpop.f32.mrb[0].mxu0
      %867 = vmatprep.mubr.f32.mxu0 0.0
      %868 = vmatmul.mubr.f32.gmra.mrb[0].mxu0 %v235
      %v869 = vpop.f32.mrb[0].mxu0
      %v870 = vadd.f32 0.0, %v869
      %v871 = vpop.f32.mrb[0].mxu0
      %872 = vmatprep.mubr.f32.mxu0 0.0
      %873 = vmatmul.mubr.f32.gmra.mrb[0].mxu0 %v238
      %v874 = vpop.f32.mrb[0].mxu0
      %v875 = vadd.f32 0.0, %v874
      %v876 = vpop.f32.mrb[0].mxu0
      %877 = vmatprep.mubr.f32.mxu0 0.0
      %878 = vmatmul.mubr.f32.gmra.mrb[0].mxu0 %v241
      %v879 = vpop.f32.mrb[0].mxu0
      %v880 = vadd.f32 0.0, %v879
      %v881 = vpop.f32.mrb[0].mxu0
      %882 = vmatprep.mubr.f32.mxu0 0.0
      %883 = vmatmul.mubr.f32.gmra.mrb[0].mxu0 %v244
      %v884 = vpop.f32.mrb[0].mxu0
      %v885 = vadd.f32 0.0, %v884
      %v886 = vpop.f32.mrb[0].mxu0
      %887 = vmatprep.mubr.f32.mxu0 0.0
      %888 = vmatmul.mubr.f32.gmra.mrb[0].mxu0 %v247
      %v889 = vpop.f32.mrb[0].mxu0
      %v890 = vadd.f32 0.0, %v889
      %v891 = vpop.f32.mrb[0].mxu0
      %892 = vmatprep.mubr.f32.mxu0 0.0
      %893 = vmatmul.mubr.f32.gmra.mrb[0].mxu0 %v250
      %v894 = vpop.f32.mrb[0].mxu0
      %v895 = vadd.f32 0.0, %v894
      %v896 = vpop.f32.mrb[0].mxu0
      %897 = vmatprep.mubr.f32.mxu0 0.0
      %898 = vmatmul.mubr.f32.gmra.mrb[0].mxu0 %v253
      %v899 = vpop.f32.mrb[0].mxu0
      %v900 = vadd.f32 0.0, %v899
      %v901 = vpop.f32.mrb[0].mxu0
      %902 = vmatprep.mubr.f32.mxu0 0.0
      %903 = vmatmul.mubr.f32.gmra.mrb[0].mxu0 %v256
      %v904 = vpop.f32.mrb[0].mxu0
      %v905 = vadd.f32 0.0, %v904
      %v906 = vpop.f32.mrb[0].mxu0
      %907 = vmatprep.mubr.f32.mxu0 0.0
      %908 = vmatmul.mubr.f32.gmra.mrb[0].mxu0 %v259
      %v909 = vpop.f32.mrb[0].mxu0
      %v910 = vadd.f32 0.0, %v909
      %v911 = vpop.f32.mrb[0].mxu0
      %912 = vmatprep.mubr.f32.mxu0 0.0
      %913 = vmatmul.mubr.f32.gmra.mrb[0].mxu0 %v262
      %v914 = vpop.f32.mrb[0].mxu0
      %v915 = vadd.f32 0.0, %v914
      %v916 = vpop.f32.mrb[0].mxu0
      %917 = vmatprep.mubr.f32.mxu0 0.0
      %918 = vmatmul.mubr.f32.gmra.mrb[0].mxu0 %v265
      %v919 = vpop.f32.mrb[0].mxu0
      %v920 = vadd.f32 0.0, %v919
      %v921 = vpop.f32.mrb[0].mxu0
      %922 = vmatprep.mubr.f32.mxu0 0.0
      %923 = vmatmul.mubr.f32.gmra.mrb[0].mxu0 %v268
      %v924 = vpop.f32.mrb[0].mxu0
      %v925 = vadd.f32 0.0, %v924
      %v926 = vpop.f32.mrb[0].mxu0
      %927 = vmatprep.mubr.f32.mxu0 0.0
      %928 = vmatmul.mubr.f32.gmra.mrb[0].mxu0 %v271
      %v929 = vpop.f32.mrb[0].mxu0
      %v930 = vadd.f32 0.0, %v929
      %v931 = vpop.f32.mrb[0].mxu0
      %932 = vmatprep.mubr.f32.mxu0 0.0
      %933 = vmatmul.mubr.f32.gmra.mrb[0].mxu0 %v274
      %v934 = vpop.f32.mrb[0].mxu0
      %v935 = vadd.f32 0.0, %v934
      %v936 = vpop.f32.mrb[0].mxu0
      %937 = vmatprep.mubr.f32.mxu0 0.0
      %938 = vmatmul.mubr.f32.gmra.mrb[0].mxu0 %v277
      %v939 = vpop.f32.mrb[0].mxu0
      %v940 = vadd.f32 0.0, %v939
      %v941 = vpop.f32.mrb[0].mxu0
      %942 = vmatprep.mubr.f32.mxu0 0.0
      %943 = vmatmul.mubr.f32.gmra.mrb[0].mxu0 %v280
      %v944 = vpop.f32.mrb[0].mxu0
      %v945 = vadd.f32 0.0, %v944
      %v946 = vpop.f32.mrb[0].mxu0
      %947 = vmatprep.mubr.f32.mxu0 0.0
      %948 = vmatmul.mubr.f32.gmra.mrb[0].mxu0 %v283
      %v949 = vpop.f32.mrb[0].mxu0
      %v950 = vadd.f32 0.0, %v949
      %v951 = vpop.f32.mrb[0].mxu0
      %952 = vmatprep.mubr.f32.mxu0 0.0
      %953 = vmatmul.mubr.f32.gmra.mrb[0].mxu0 %v286
      %v954 = vpop.f32.mrb[0].mxu0
      %v955 = vadd.f32 0.0, %v954
      %v956 = vpop.f32.mrb[0].mxu0
      %957 = vmatprep.mubr.f32.mxu0 0.0
      %958 = vmatmul.mubr.f32.gmra.mrb[0].mxu0 %v289
      %v959 = vpop.f32.mrb[0].mxu0
      %v960 = vadd.f32 0.0, %v959
      %v961 = vpop.f32.mrb[0].mxu0
      %962 = vmatprep.mubr.f32.mxu0 0.0
      %963 = vmatmul.mubr.f32.gmra.mrb[0].mxu0 %v292
      %v964 = vpop.f32.mrb[0].mxu0
      %v965 = vadd.f32 0.0, %v964
      %v966 = vpop.f32.mrb[0].mxu0
      %967 = vmatprep.mubr.f32.mxu0 0.0
      %968 = vmatmul.mubr.f32.gmra.mrb[0].mxu0 %v295
      %v969 = vpop.f32.mrb[0].mxu0
      %v970 = vadd.f32 0.0, %v969
      %v971 = vpop.f32.mrb[0].mxu0
      %972 = vmatprep.mubr.f32.mxu0 0.0
      %973 = vmatmul.mubr.f32.gmra.mrb[0].mxu0 %v298
      %v974 = vpop.f32.mrb[0].mxu0
      %v975 = vadd.f32 0.0, %v974
      %v976 = vpop.f32.mrb[0].mxu0
      %977 = vmatprep.mubr.f32.mxu0 0.0
      %978 = vmatmul.mubr.f32.gmra.mrb[0].mxu0 %v301
      %v979 = vpop.f32.mrb[0].mxu0
      %v980 = vadd.f32 0.0, %v979
      %v981 = vpop.f32.mrb[0].mxu0
      %982 = vmatprep.mubr.f32.mxu0 0.0
      %983 = vmatmul.mubr.f32.gmra.mrb[0].mxu0 %v304
      %v984 = vpop.f32.mrb[0].mxu0
      %v985 = vadd.f32 0.0, %v984
      %v986 = vpop.f32.mrb[0].mxu0
      %987 = vmatprep.mubr.f32.mxu0 0.0
      %988 = vmatmul.mubr.f32.gmra.mrb[0].mxu0 %v307
      %v989 = vpop.f32.mrb[0].mxu0
      %v990 = vadd.f32 0.0, %v989
      %v991 = vpop.f32.mrb[0].mxu0
      %992 = vmatprep.mubr.f32.mxu0 0.0
      %993 = vmatmul.mubr.f32.gmra.mrb[0].mxu0 %v310
      %v994 = vpop.f32.mrb[0].mxu0
      %v995 = vadd.f32 0.0, %v994
      %v996 = vpop.f32.mrb[0].mxu0
      %997 = vmatprep.mubr.f32.mxu0 0.0
      %998 = vmatmul.mubr.f32.gmra.mrb[0].mxu0 %v313
      %v999 = vpop.f32.mrb[0].mxu0
      %v1000 = vadd.f32 0.0, %v999
      %v1001 = vpop.f32.mrb[0].mxu0
      %1002 = vmatprep.mubr.f32.mxu0 0.0
      %1003 = vmatmul.mubr.f32.gmra.mrb[0].mxu0 %v316
      %v1004 = vpop.f32.mrb[0].mxu0
      %v1005 = vadd.f32 0.0, %v1004
      %v1006 = vpop.f32.mrb[0].mxu0
      %1007 = vmatprep.mubr.f32.mxu0 0.0
      %1008 = vmatmul.mubr.f32.gmra.mrb[0].mxu0 %v785
      %v1009 = vpop.f32.mrb[0].mxu0
      %v1010 = vadd.f32 0.0, %v1009
      %v1011 = vpop.f32.mrb[0].mxu0
      %1012 = vmatprep.mubr.f32.mxu0 0.0
      %1013 = vmatmul.mubr.f32.gmra.mrb[0].mxu0 %v788
      %v1014 = vpop.f32.mrb[0].mxu0
      %v1015 = vadd.f32 0.0, %v1014
      %v1016 = vpop.f32.mrb[0].mxu0
      %1017 = vdwg.mxu0
      %v1018 = vadd.f32 %v623, %v860
      %v1019 = vadd.f32 %v628, %v865
      %v1020 = vadd.f32 %v633, %v870
      %v1021 = vadd.f32 %v638, %v875
      %v1022 = vadd.f32 %v643, %v880
      %v1023 = vadd.f32 %v648, %v885
      %v1024 = vadd.f32 %v653, %v890
      %v1025 = vadd.f32 %v658, %v895
      %v1026 = vadd.f32 %v663, %v900
      %v1027 = vadd.f32 %v668, %v905
      %v1028 = vadd.f32 %v673, %v910
      %v1029 = vadd.f32 %v678, %v915
      %v1030 = vadd.f32 %v683, %v920
      %v1031 = vadd.f32 %v688, %v925
      %v1032 = vadd.f32 %v693, %v930
      %v1033 = vadd.f32 %v698, %v935
      %v1034 = vadd.f32 %v703, %v940
      %v1035 = vadd.f32 %v708, %v945
      %v1036 = vadd.f32 %v713, %v950
      %v1037 = vadd.f32 %v718, %v955
      %v1038 = vadd.f32 %v723, %v960
      %v1039 = vadd.f32 %v728, %v965
      %v1040 = vadd.f32 %v733, %v970
      %v1041 = vadd.f32 %v738, %v975
      %v1042 = vadd.f32 %v743, %v980
      %v1043 = vadd.f32 %v748, %v985
      %v1044 = vadd.f32 %v753, %v990
      %v1045 = vadd.f32 %v758, %v995
      %v1046 = vadd.f32 %v763, %v1000
      %v1047 = vadd.f32 %v768, %v1005
      %v1048 = vadd.f32 %v773, %v1010
      %v1049 = vadd.f32 %v778, %v1015
      %v1050 = vadd.f32 %v1018, %v1019
      %v1051 = vadd.f32 %v1050, %v1020
      %v1052 = vadd.f32 %v1051, %v1021
      %v1053 = vadd.f32 %v1052, %v1022
      %v1054 = vadd.f32 %v1053, %v1023
      %v1055 = vadd.f32 %v1054, %v1024
      %v1056 = vadd.f32 %v1055, %v1025
      %v1057 = vadd.f32 %v1056, %v1026
      %v1058 = vadd.f32 %v1057, %v1027
      %v1059 = vadd.f32 %v1058, %v1028
      %v1060 = vadd.f32 %v1059, %v1029
      %v1061 = vadd.f32 %v1060, %v1030
      %v1062 = vadd.f32 %v1061, %v1031
      %v1063 = vadd.f32 %v1062, %v1032
      %v1064 = vadd.f32 %v1063, %v1033
      %v1065 = vadd.f32 %v1064, %v1034
      %v1066 = vadd.f32 %v1065, %v1035
      %v1067 = vadd.f32 %v1066, %v1036
      %v1068 = vadd.f32 %v1067, %v1037
      %v1069 = vadd.f32 %v1068, %v1038
      %v1070 = vadd.f32 %v1069, %v1039
      %v1071 = vadd.f32 %v1070, %v1040
      %v1072 = vadd.f32 %v1071, %v1041
      %v1073 = vadd.f32 %v1072, %v1042
      %v1074 = vadd.f32 %v1073, %v1043
      %v1075 = vadd.f32 %v1074, %v1044
      %v1076 = vadd.f32 %v1075, %v1045
      %v1077 = vadd.f32 %v1076, %v1046
      %v1078 = vadd.f32 %v1077, %v1047
      %v1079 = vadd.f32 %v1078, %v1048
      %v1080 = vadd.f32 %v1079, %v1049
      %1081 = vst [vmem:[%s175] sm:$0xff] %v1080
      %v1082 = vmul.f32 %v1018, %v1018
      %v1083 = vmul.f32 %v1019, %v1019
      %v1084 = vmul.f32 %v1020, %v1020
      %v1085 = vmul.f32 %v1021, %v1021
      %v1086 = vmul.f32 %v1022, %v1022
      %v1087 = vmul.f32 %v1023, %v1023
      %v1088 = vmul.f32 %v1024, %v1024
      %v1089 = vmul.f32 %v1025, %v1025
      %v1090 = vmul.f32 %v1026, %v1026
      %v1091 = vmul.f32 %v1027, %v1027
      %v1092 = vmul.f32 %v1028, %v1028
      %v1093 = vmul.f32 %v1029, %v1029
      %v1094 = vmul.f32 %v1030, %v1030
      %v1095 = vmul.f32 %v1031, %v1031
      %v1096 = vmul.f32 %v1032, %v1032
      %v1097 = vmul.f32 %v1033, %v1033
      %v1098 = vmul.f32 %v1034, %v1034
      %v1099 = vmul.f32 %v1035, %v1035
      %v1100 = vmul.f32 %v1036, %v1036
      %v1101 = vmul.f32 %v1037, %v1037
      %v1102 = vmul.f32 %v1038, %v1038
      %v1103 = vmul.f32 %v1039, %v1039
      %v1104 = vmul.f32 %v1040, %v1040
      %v1105 = vmul.f32 %v1041, %v1041
      %v1106 = vmul.f32 %v1042, %v1042
      %v1107 = vmul.f32 %v1043, %v1043
      %v1108 = vmul.f32 %v1044, %v1044
      %v1109 = vmul.f32 %v1045, %v1045
      %v1110 = vmul.f32 %v1046, %v1046
      %v1111 = vmul.f32 %v1047, %v1047
      %v1112 = vmul.f32 %v1048, %v1048
      %v1113 = vmul.f32 %v1049, %v1049
      %v1114 = vadd.f32 %v1082, %v1083
      %v1115 = vadd.f32 %v1114, %v1084
      %v1116 = vadd.f32 %v1115, %v1085
      %v1117 = vadd.f32 %v1116, %v1086
      %v1118 = vadd.f32 %v1117, %v1087
      %v1119 = vadd.f32 %v1118, %v1088
      %v1120 = vadd.f32 %v1119, %v1089
      %v1121 = vadd.f32 %v1120, %v1090
      %v1122 = vadd.f32 %v1121, %v1091
      %v1123 = vadd.f32 %v1122, %v1092
      %v1124 = vadd.f32 %v1123, %v1093
      %v1125 = vadd.f32 %v1124, %v1094
      %v1126 = vadd.f32 %v1125, %v1095
      %v1127 = vadd.f32 %v1126, %v1096
      %v1128 = vadd.f32 %v1127, %v1097
      %v1129 = vadd.f32 %v1128, %v1098
      %v1130 = vadd.f32 %v1129, %v1099
      %v1131 = vadd.f32 %v1130, %v1100
      %v1132 = vadd.f32 %v1131, %v1101
      %v1133 = vadd.f32 %v1132, %v1102
      %v1134 = vadd.f32 %v1133, %v1103
      %v1135 = vadd.f32 %v1134, %v1104
      %v1136 = vadd.f32 %v1135, %v1105
      %v1137 = vadd.f32 %v1136, %v1106
      %v1138 = vadd.f32 %v1137, %v1107
      %v1139 = vadd.f32 %v1138, %v1108
      %v1140 = vadd.f32 %v1139, %v1109
      %v1141 = vadd.f32 %v1140, %v1110
      %v1142 = vadd.f32 %v1141, %v1111
      %v1143 = vadd.f32 %v1142, %v1112
      %v1144 = vadd.f32 %v1143, %v1113
      %1145 = vst [vmem:[%s179] sm:$0xff] %v1144
      %p1146 = scmp.lt.s32.totalorder %s15, 1
      %s1147 = scalar_select %p1146, %s15, 1
      %s1148 = smul.addr %s1147, 8
      %s1149 = scalar_lea.vmem %s2, %s1148
      %p1150 = scmp.lt.s32.totalorder %s15, 1
      %s1151 = scalar_select %p1150, %s15, 1
      %s1152 = smul.addr %s1151, 8
      %s1153 = scalar_lea.vmem %s3, %s1152
      // Predicated region
      $region29: #{conv_block_forward.2} parent=27 // pred_check
        %p1154 = pneg %p80
      $region30: #{conv_block_forward.2} parent=27 // pred_check_branch
        %1156 = sbr.rel (%p1154) target = $region32
      $region31: #{conv_block_forward.2} parent=27 // pred_region
        _
      $region32: #{conv_block_forward.2} parent=27 // pred_fallthru
        _
      // Predicated region
      $region33: #{conv_block_forward.2} parent=27 // pred_check
        %p1157 = pneg %p106
      $region34: #{conv_block_forward.2} parent=27 // pred_check_branch
        %1159 = sbr.rel (%p1157) target = $region36
      $region35: #{conv_block_forward.2} parent=27 // pred_region
        _
      $region36: #{conv_block_forward.2} parent=27 // pred_fallthru
        _
    $region28: #{conv_block_forward.2} parent=5 // pred_fallthru
      _
    %p1160 = scmp.le.s32.totalorder 2, %s10
    // Predicated region
    $region37: #{conv_block_forward.2} parent=5 // pred_check
      %p1161 = pneg %p1160
    $region38: #{conv_block_forward.2} parent=5 // pred_check_branch
      %1163 = sbr.rel (%p1161) target = $region40
    $region39: #{conv_block_forward.2} parent=5 // pred_region
      %s1164 = ssub.s32 %s10, 2
      // Predicated region
      $region41: #{conv_block_forward.2} parent=39 // pred_check
        %p1165 = pneg %p86
      $region42: #{conv_block_forward.2} parent=39 // pred_check_branch
        %1167 = sbr.rel (%p1165) target = $region44
      $region43: #{conv_block_forward.2} parent=39 // pred_region
        %p1168 = scmp.lt.s32.totalorder %s16, 1
        %s1169 = scalar_select %p1168, %s16, 1
        %s1170 = smul.addr %s1169, 8
        %s1171 = scalar_lea.vmem %s2, %s1170
      $region44: #{conv_block_forward.2} parent=39 // pred_fallthru
        _
      // Predicated region
      $region45: #{conv_block_forward.2} parent=39 // pred_check
        %p1172 = pneg %p112
      $region46: #{conv_block_forward.2} parent=39 // pred_check_branch
        %1174 = sbr.rel (%p1172) target = $region48
      $region47: #{conv_block_forward.2} parent=39 // pred_region
        %p1175 = scmp.lt.s32.totalorder %s16, 1
        %s1176 = scalar_select %p1175, %s16, 1
        %s1177 = smul.addr %s1176, 8
        %s1178 = scalar_lea.vmem %s3, %s1177
      $region48: #{conv_block_forward.2} parent=39 // pred_fallthru
        _
    $region40: #{conv_block_forward.2} parent=5 // pred_fallthru
      _
  $region6: #{conv_block_forward.2} parent=0 // loop_footer
    %s14 = sadd.s32 1, %s10
  $region7: #{conv_block_forward.2} parent=0 // loop_footer_branch
    %9 = sbr.rel target = $region3
  $region8: #{conv_block_forward.2} parent=0 // loop_exit
    _

// kernel: conv_block_forward.3
$region0: #{conv_block_forward.3}
  #allocation0 [shape = 'u32[]', space=smem, size = 0x4, offset = 0x4, fixed_abs, tag = 'smem constant byte address 0x4 - core index']
  #allocation1 [shape = 'u32[144,128]{1,0:T(1,128)}', space=vmem, size = 0x12000, scoped, tag = 'internal scratch']
  #allocation2 [shape = 'f32[8,2,16,128]{3,2,1,0:T(8,128)}', space=vmem, size = 0x20000, scoped, tag = 'scratch operand']
  %s0 = inlined_call_operand.vmem [shape: f32[2,18,16,12], index: 0, kind: input, shape index: {}]
  %s1 = inlined_call_operand.vmem [shape: f32[3,12,128], index: 1, kind: input, shape index: {}]
  %s2 = inlined_call_operand.vmem [shape: f32[1,128], index: 2, kind: input, shape index: {}]
  %s3 = inlined_call_operand.vmem [shape: f32[1,128], index: 3, kind: input, shape index: {}]
  %s4 = inlined_call_operand.vmem [shape: f32[16,8,128], index: 4, kind: output, shape index: {}]
  %s5 = sld [smem:[#allocation0]]
  $region49: #{conv_block_forward.3} parent=0
    _
  %s7 = ssub.s32 1, %s5
  %s8 = scalar_select 0, %s7, %s5
  loop: start=0, step=1, limit=4
  $region2: #{conv_block_forward.3} parent=0 // loop_pre_header
    _
  $region3: #{conv_block_forward.3} parent=0 // loop_header
    %s10 = sphi 0, %s14
    %p11 = scmp.ge.s32.totalorder %s10, 4
    %s20 = sphi 0, %s22
    %s23 = sphi 0, %s20
    %s24 = sphi 0, %s23
    %s40 = sphi 0, %s24
    %s44 = sphi 0, %s44
    %s46 = sphi 0, %s44
    %s47 = sphi 0, %s46
    %s61 = sphi 0, %s47
    %s65 = sphi 0, %s65
    %s67 = sphi 0, %s65
    %s68 = sphi 0, %s67
    %s82 = sphi 0, %s68
    %s86 = sphi 0, %s86
    %s88 = sphi 0, %s86
    %s89 = sphi 0, %s88
    %s103 = sphi 0, %s89
    %s109 = sphi 0, %s111
    %s112 = sphi 0, %s109
    %s113 = sphi 0, %s112
    %s129 = sphi 0, %s113
  $region4: #{conv_block_forward.3} parent=0 // loop_header_branch
    %13 = sbr.rel (%p11) target = $region8
  $region5: #{conv_block_forward.3} parent=0 // loop_body
    %s15 = ssub.s32 %s10, 1
    %s16 = ssub.s32 %s10, 2
    %s17 = sadd.s32 %s10, 1
    %s18 = ssub.s32 %s10, %s17
    %p19 = scmp.eq.s32.totalorder %s18, 0
    %s21 = sadd.s32 %s20, 1
    %s22 = scalar_select %p19, %s20, %s21
    %p25 = pneg %p19
    %p26 = scmp.eq.s32.totalorder %s10, 1
    %p27 = por %p25, %p26
    %p28 = scmp.ne.s32.totalorder %s20, %s23
    %p29 = scmp.eq.s32.totalorder %s10, 0
    %p30 = por %p28, %p29
    %p31 = scmp.ne.s32.totalorder %s20, %s23
    %p32 = scmp.eq.s32.totalorder %s15, 1
    %p33 = por %p31, %p32
    %p34 = scmp.ne.s32.totalorder %s23, %s24
    %p35 = scmp.eq.s32.totalorder %s15, 0
    %p36 = por %p34, %p35
    %p37 = scmp.ne.s32.totalorder %s23, %s24
    %p38 = scmp.eq.s32.totalorder %s16, 1
    %p39 = por %p37, %p38
    %p41 = scmp.ne.s32.totalorder %s24, %s40
    %p42 = scmp.eq.s32.totalorder %s16, 0
    %p43 = por %p41, %p42
    %s45 = sadd.s32 %s44, 1
    %p48 = scmp.eq.s32.totalorder %s10, 1
    %p49 = scmp.ne.s32.totalorder %s44, %s46
    %p50 = scmp.eq.s32.totalorder %s10, 0
    %p51 = por %p49, %p50
    %p52 = scmp.ne.s32.totalorder %s44, %s46
    %p53 = scmp.eq.s32.totalorder %s15, 1
    %p54 = por %p52, %p53
    %p55 = scmp.ne.s32.totalorder %s46, %s47
    %p56 = scmp.eq.s32.totalorder %s15, 0
    %p57 = por %p55, %p56
    %p58 = scmp.ne.s32.totalorder %s46, %s47
    %p59 = scmp.eq.s32.totalorder %s16, 1
    %p60 = por %p58, %p59
    %p62 = scmp.ne.s32.totalorder %s47, %s61
    %p63 = scmp.eq.s32.totalorder %s16, 0
    %p64 = por %p62, %p63
    %s66 = sadd.s32 %s65, 1
    %p69 = scmp.eq.s32.totalorder %s10, 1
    %p70 = scmp.ne.s32.totalorder %s65, %s67
    %p71 = scmp.eq.s32.totalorder %s10, 0
    %p72 = por %p70, %p71
    %p73 = scmp.ne.s32.totalorder %s65, %s67
    %p74 = scmp.eq.s32.totalorder %s15, 1
    %p75 = por %p73, %p74
    %p76 = scmp.ne.s32.totalorder %s67, %s68
    %p77 = scmp.eq.s32.totalorder %s15, 0
    %p78 = por %p76, %p77
    %p79 = scmp.ne.s32.totalorder %s67, %s68
    %p80 = scmp.eq.s32.totalorder %s16, 1
    %p81 = por %p79, %p80
    %p83 = scmp.ne.s32.totalorder %s68, %s82
    %p84 = scmp.eq.s32.totalorder %s16, 0
    %p85 = por %p83, %p84
    %s87 = sadd.s32 %s86, 1
    %p90 = scmp.eq.s32.totalorder %s10, 1
    %p91 = scmp.ne.s32.totalorder %s86, %s88
    %p92 = scmp.eq.s32.totalorder %s10, 0
    %p93 = por %p91, %p92
    %p94 = scmp.ne.s32.totalorder %s86, %s88
    %p95 = scmp.eq.s32.totalorder %s15, 1
    %p96 = por %p94, %p95
    %p97 = scmp.ne.s32.totalorder %s88, %s89
    %p98 = scmp.eq.s32.totalorder %s15, 0
    %p99 = por %p97, %p98
    %p100 = scmp.ne.s32.totalorder %s88, %s89
    %p101 = scmp.eq.s32.totalorder %s16, 1
    %p102 = por %p100, %p101
    %p104 = scmp.ne.s32.totalorder %s89, %s103
    %p105 = scmp.eq.s32.totalorder %s16, 0
    %p106 = por %p104, %p105
    %s107 = ssub.s32 %s10, %s17
    %p108 = scmp.eq.s32.totalorder %s107, 0
    %s110 = sadd.s32 %s109, 1
    %s111 = scalar_select %p108, %s109, %s110
    %p114 = pneg %p108
    %p115 = scmp.eq.s32.totalorder %s10, 1
    %p116 = por %p114, %p115
    %p117 = scmp.ne.s32.totalorder %s109, %s112
    %p118 = scmp.eq.s32.totalorder %s10, 0
    %p119 = por %p117, %p118
    %p120 = scmp.ne.s32.totalorder %s109, %s112
    %p121 = scmp.eq.s32.totalorder %s15, 1
    %p122 = por %p120, %p121
    %p123 = scmp.ne.s32.totalorder %s112, %s113
    %p124 = scmp.eq.s32.totalorder %s15, 0
    %p125 = por %p123, %p124
    %p126 = scmp.ne.s32.totalorder %s112, %s113
    %p127 = scmp.eq.s32.totalorder %s16, 1
    %p128 = por %p126, %p127
    %p130 = scmp.ne.s32.totalorder %s113, %s129
    %p131 = scmp.eq.s32.totalorder %s16, 0
    %p132 = por %p130, %p131
    %p133 = scmp.le.s32.totalorder 1, %s10
    %p134 = scmp.lt.s32.totalorder %s10, 3
    %p135 = pnand %p133, %p134
    %p136 = pneg %p135
    // Predicated region
    $region9: #{conv_block_forward.3} parent=5 // pred_check
      _
    $region10: #{conv_block_forward.3} parent=5 // pred_check_branch
      %138 = sbr.rel (%p135) target = $region12
    $region11: #{conv_block_forward.3} parent=5 // pred_region
      %s139 = ssub.s32 %s10, 1
      // Predicated region
      $region13: #{conv_block_forward.3} parent=11 // pred_check
        %p140 = pneg %p57
      $region14: #{conv_block_forward.3} parent=11 // pred_check_branch
        %142 = sbr.rel (%p140) target = $region16
      $region15: #{conv_block_forward.3} parent=11 // pred_region
        _
      $region16: #{conv_block_forward.3} parent=11 // pred_fallthru
        _
      // Predicated region
      $region17: #{conv_block_forward.3} parent=11 // pred_check
        %p143 = pneg %p78
      $region18: #{conv_block_forward.3} parent=11 // pred_check_branch
        %145 = sbr.rel (%p143) target = $region20
      $region19: #{conv_block_forward.3} parent=11 // pred_region
        _
      $region20: #{conv_block_forward.3} parent=11 // pred_fallthru
        _
      // Predicated region
      $region21: #{conv_block_forward.3} parent=11 // pred_check
        %p146 = pneg %p99
      $region22: #{conv_block_forward.3} parent=11 // pred_check_branch
        %148 = sbr.rel (%p146) target = $region24
      $region23: #{conv_block_forward.3} parent=11 // pred_region
        _
      $region24: #{conv_block_forward.3} parent=11 // pred_fallthru
        _
    $region12: #{conv_block_forward.3} parent=5 // pred_fallthru
      _
    %p149 = scmp.lt.s32.totalorder %s10, 2
    // Predicated region
    $region25: #{conv_block_forward.3} parent=5 // pred_check
      %p150 = pneg %p149
    $region26: #{conv_block_forward.3} parent=5 // pred_check_branch
      %152 = sbr.rel (%p150) target = $region28
    $region27: #{conv_block_forward.3} parent=5 // pred_region
      // Predicated region
      $region29: #{conv_block_forward.3} parent=27 // pred_check
        %p153 = pneg %p30
      $region30: #{conv_block_forward.3} parent=27 // pred_check_branch
        %155 = sbr.rel (%p153) target = $region32
      $region31: #{conv_block_forward.3} parent=27 // pred_region
        %p156 = scmp.lt.s32.totalorder %s10, 1
        %s157 = scalar_select %p156, %s10, 1
        %s158 = smul.addr %s157, 36
        %s159 = smul.addr %s158, 8
        %s160 = scalar_lea.vmem %s0, %s159
      $region32: #{conv_block_forward.3} parent=27 // pred_fallthru
        _
    $region28: #{conv_block_forward.3} parent=5 // pred_fallthru
      _
    %p161 = scmp.le.s32.totalorder 1, %s10
    %p162 = scmp.lt.s32.totalorder %s10, 3
    %p163 = pnand %p161, %p162
    %p164 = pneg %p163
    // Predicated region
    $region33: #{conv_block_forward.3} parent=5 // pred_check
      _
    $region34: #{conv_block_forward.3} parent=5 // pred_check_branch
      %166 = sbr.rel (%p163) target = $region36
    $region35: #{conv_block_forward.3} parent=5 // pred_region
      %s167 = ssub.s32 %s10, 1
      %p168 = scmp.lt.s32.totalorder %s15, 1
      %s169 = scalar_select %p168, %s15, 1
      %s170 = smul.addr %s169, 36
      %s171 = smul.addr %s170, 8
      %s172 = scalar_lea.vmem %s0, %s171
      %p173 = pneg %p36
      %p174 = pneg %p33
      %p175 = pneg %p57
      %p176 = pneg %p54
      %p177 = pneg %p78
      %p178 = pneg %p75
      %p179 = pneg %p99
      %p180 = pneg %p96
      %p181 = pneg %p125
      %p182 = pneg %p122
      %s183 = smul.u32 8, %s15
      %p184 = scmp.lt.s32.totalorder %s183, 15
      %s185 = scalar_select %p184, %s183, 15
      %s186 = smul.addr %s185, 8
      %s187 = scalar_lea.vmem %s4, %s186
      %p188 = scmp.lt.s32.totalorder %s15, 1
      %s189 = scalar_select %p188, %s15, 1
      %s190 = smul.addr %s189, 36
      %s191 = smul.addr %s190, 8
      %s192 = scalar_lea.vmem %s0, %s191
      %s193 = smul.u32 8, %s15
      %p194 = scmp.lt.s32.totalorder %s193, 15
      %s195 = scalar_select %p194, %s193, 15
      %s196 = smul.addr %s195, 8
      %s197 = scalar_lea.vmem %s4, %s196
      %s198 = smul.u32 8, %s15
      %v199 = vld [vmem:[%s192] sm:$0xff]
      %v200 = vld [vmem:[%s192 + $0x8] sm:$0xff]
      %v201 = vld [vmem:[%s192 + $0x10] sm:$0xff]
      %v202 = vld [vmem:[%s192 + $0x18] sm:$0xff]
      %v203 = vld [vmem:[%s192 + $0x20] sm:$0xff]
      %v204 = vld [vmem:[%s192 + $0x28] sm:$0xff]
      %v205 = vld [vmem:[%s192 + $0x30] sm:$0xff]
      %v206 = vld [vmem:[%s192 + $0x38] sm:$0xff]
      %v207 = vld [vmem:[%s192 + $0x40] sm:$0xff]
      %v208 = vld [vmem:[%s192 + $0x48] sm:$0xff]
      %v209 = vld [vmem:[%s192 + $0x50] sm:$0xff]
      %v210 = vld [vmem:[%s192 + $0x58] sm:$0xff]
      %v211 = vld [vmem:[%s192 + $0x60] sm:$0xff]
      %v212 = vld [vmem:[%s192 + $0x68] sm:$0xff]
      %v213 = vld [vmem:[%s192 + $0x70] sm:$0xff]
      %v214 = vld [vmem:[%s192 + $0x78] sm:$0xff]
      %v215 = vld [vmem:[%s192 + $0x80] sm:$0xff]
      %v216 = vld [vmem:[%s192 + $0x88] sm:$0xff]
      %v217 = vld [vmem:[%s192 + $0x90] sm:$0xff]
      %v218 = vld [vmem:[%s192 + $0x98] sm:$0xff]
      %v219 = vld [vmem:[%s192 + $0xa0] sm:$0xff]
      %v220 = vld [vmem:[%s192 + $0xa8] sm:$0xff]
      %v221 = vld [vmem:[%s192 + $0xb0] sm:$0xff]
      %v222 = vld [vmem:[%s192 + $0xb8] sm:$0xff]
      %v223 = vld [vmem:[%s192 + $0xc0] sm:$0xff]
      %v224 = vld [vmem:[%s192 + $0xc8] sm:$0xff]
      %v225 = vld [vmem:[%s192 + $0xd0] sm:$0xff]
      %v226 = vld [vmem:[%s192 + $0xd8] sm:$0xff]
      %v227 = vld [vmem:[%s192 + $0xe0] sm:$0xff]
      %v228 = vld [vmem:[%s192 + $0xe8] sm:$0xff]
      %v229 = vld [vmem:[%s192 + $0xf0] sm:$0xff]
      %v230 = vld [vmem:[%s192 + $0xf8] sm:$0xff]
      %v231 = vld [vmem:[%s192 + $0x100] sm:$0xff]
      %v232 = vld [vmem:[%s192 + $0x108] sm:$0xff]
      %v233 = vld [vmem:[%s192 + $0x110] sm:$0xff]
      %v234 = vld [vmem:[%s192 + $0x118] sm:$0xff]
      %v235 = vld [vmem:[%s1] sm:$0xff]
      %v236 = vld [vmem:[%s1 + $0x8] sm:$0xf]
      %s237 = scalar_lea.vmem %s1, 16
      %v238 = vld [vmem:[%s237] sm:$0xff]
      %v239 = vld [vmem:[%s237 + $0x8] sm:$0xf]
      %vm240 = vcmask 97280
      %v242 = vsel %vm240, %v201, 0
      %v245 = vsel %vm240, %v202, 0
      %v248 = vsel %vm240, %v203, 0
      %v251 = vsel %vm240, %v204, 0
      %v254 = vsel %vm240, %v205, 0
      %v257 = vsel %vm240, %v206, 0
      %v260 = vsel %vm240, %v207, 0
      %v263 = vsel %vm240, %v208, 0
      %v266 = vsel %vm240, %v209, 0
      %v269 = vsel %vm240, %v210, 0
      %v272 = vsel %vm240, %v211, 0
      %v275 = vsel %vm240, %v212, 0
      %v278 = vsel %vm240, %v213, 0
      %v281 = vsel %vm240, %v214, 0
      %v284 = vsel %vm240, %v215, 0
      %v287 = vsel %vm240, %v216, 0
      %v290 = vsel %vm240, %v217, 0
      %v293 = vsel %vm240, %v218, 0
      %v296 = vsel %vm240, %v219, 0
      %v299 = vsel %vm240, %v220, 0
      %v302 = vsel %vm240, %v221, 0
      %v305 = vsel %vm240, %v222, 0
      %v308 = vsel %vm240, %v223, 0
      %v311 = vsel %vm240, %v224, 0
      %v314 = vsel %vm240, %v225, 0
      %v317 = vsel %vm240, %v226, 0
      %v320 = vsel %vm240, %v227, 0
      %v323 = vsel %vm240, %v228, 0
      %v326 = vsel %vm240, %v229, 0
      %v329 = vsel %vm240, %v230, 0
      %v332 = vsel %vm240, %v231, 0
      %v335 = vsel %vm240, %v232, 0
      %vm337 = vcmask 1043456
      %v339 = vsel %vm337, %v239, 0
      %341 = vmatprep.subr.mxu0 0.0
      %342 = vmatpush1.msra.mxu0 %v238
      %343 = vmatprep.subr.mxu0 0.0
      %344 = vmatpush1.msra.mxu0 %v339
      %345 = vmatprep.subr.mxu0 0.0
      %346 = vmatpush1.msra.mxu0 0.0
      %347 = vmatprep.subr.mxu0 0.0
      %348 = vmatpush1.msra.mxu0 0.0
      %349 = vmatprep.subr.mxu0 0.0
      %350 = vmatpush1.msra.mxu0 0.0
      %351 = vmatprep.subr.mxu0 0.0
      %352 = vmatpush1.msra.mxu0 0.0
      %353 = vmatprep.subr.mxu0 0.0
      %354 = vmatpush1.msra.mxu0 0.0
      %355 = vmatprep.subr.mxu0 0.0
      %356 = vmatpush1.msra.mxu0 0.0
      %357 = vmatprep.subr.mxu0 0.0
      %358 = vmatpush1.msra.mxu0 0.0
      %359 = vmatprep.subr.mxu0 0.0
      %360 = vmatpush1.msra.mxu0 0.0
      %361 = vmatprep.subr.mxu0 0.0
      %362 = vmatpush1.msra.mxu0 0.0
      %363 = vmatprep.subr.mxu0 0.0
      %364 = vmatpush1.msra.mxu0 0.0
      %365 = vmatprep.subr.mxu0 0.0
      %366 = vmatpush1.msra.mxu0 0.0
      %367 = vmatprep.subr.mxu0 0.0
      %368 = vmatpush1.msra.mxu0 0.0
      %369 = vmatprep.subr.mxu0 0.0
      %370 = vmatpush1.msra.mxu0 0.0
      %371 = vmatprep.subr.mxu0 0.0
      %372 = vmatpush1.msra.mxu0 0.0
      %373 = vmatprep.subr.mxu0 0.0
      %374 = vmatpush1.msra.mxu0 0.0
      %375 = vmatprep.subr.mxu0 0.0
      %376 = vmatpush1.msra.mxu0 0.0
      %377 = vmatprep.subr.mxu0 0.0
      %378 = vmatpush1.msra.mxu0 0.0
      %379 = vmatprep.subr.mxu0 0.0
      %380 = vmatpush1.msra.mxu0 0.0
      %381 = vmatprep.subr.mxu0 0.0
      %382 = vmatpush1.msra.mxu0 0.0
      %383 = vmatprep.subr.mxu0 0.0
      %384 = vmatpush1.msra.mxu0 0.0
      %385 = vmatprep.subr.mxu0 0.0
      %386 = vmatpush1.msra.mxu0 0.0
      %387 = vmatprep.subr.mxu0 0.0
      %388 = vmatpush1.msra.mxu0 0.0
      %389 = vmatprep.subr.mxu0 0.0
      %390 = vmatpush1.msra.mxu0 0.0
      %391 = vmatprep.subr.mxu0 0.0
      %392 = vmatpush1.msra.mxu0 0.0
      %393 = vmatprep.subr.mxu0 0.0
      %394 = vmatpush1.msra.mxu0 0.0
      %395 = vmatprep.subr.mxu0 0.0
      %396 = vmatpush1.msra.mxu0 0.0
      %397 = vmatprep.subr.mxu0 0.0
      %398 = vmatpush1.msra.mxu0 0.0
      %399 = vmatprep.subr.mxu0 0.0
      %400 = vmatpush1.msra.mxu0 0.0
      %401 = vmatprep.subr.mxu0 0.0
      %402 = vmatpush1.msra.mxu0 0.0
      %403 = vmatprep.subr.mxu0 0.0
      %404 = vmatpush1.msra.mxu0 0.0
      %405 = vmatprep.mubr.f32.mxu0 0.0
      %406 = vmatmul.mubr.f32.gmra.mrb[0].mxu0 %v242
      %v407 = vpop.f32.mrb[0].mxu0
      %v408 = vadd.f32 0.0, %v407
      %v409 = vpop.f32.mrb[0].mxu0
      %410 = vmatprep.mubr.f32.mxu0 0.0
      %411 = vmatmul.mubr.f32.gmra.mrb[0].mxu0 %v245
      %v412 = vpop.f32.mrb[0].mxu0
      %v413 = vadd.f32 0.0, %v412
      %v414 = vpop.f32.mrb[0].mxu0
      %415 = vmatprep.mubr.f32.mxu0 0.0
      %416 = vmatmul.mubr.f32.gmra.mrb[0].mxu0 %v248
      %v417 = vpop.f32.mrb[0].mxu0
      %v418 = vadd.f32 0.0, %v417
      %v419 = vpop.f32.mrb[0].mxu0
      %420 = vmatprep.mubr.f32.mxu0 0.0
      %421 = vmatmul.mubr.f32.gmra.mrb[0].mxu0 %v251
      %v422 = vpop.f32.mrb[0].mxu0
      %v423 = vadd.f32 0.0, %v422
      %v424 = vpop.f32.mrb[0].mxu0
      %425 = vmatprep.mubr.f32.mxu0 0.0
      %426 = vmatmul.mubr.f32.gmra.mrb[0].mxu0 %v254
      %v427 = vpop.f32.mrb[0].mxu0
      %v428 = vadd.f32 0.0, %v427
      %v429 = vpop.f32.mrb[0].mxu0
      %430 = vmatprep.mubr.f32.mxu0 0.0
      %431 = vmatmul.mubr.f32.gmra.mrb[0].mxu0 %v257
      %v432 = vpop.f32.mrb[0].mxu0
      %v433 = vadd.f32 0.0, %v432
      %v434 = vpop.f32.mrb[0].mxu0
      %435 = vmatprep.mubr.f32.mxu0 0.0
      %436 = vmatmul.mubr.f32.gmra.mrb[0].mxu0 %v260
      %v437 = vpop.f32.mrb[0].mxu0
      %v438 = vadd.f32 0.0, %v437
      %v439 = vpop.f32.mrb[0].mxu0
      %440 = vmatprep.mubr.f32.mxu0 0.0
      %441 = vmatmul.mubr.f32.gmra.mrb[0].mxu0 %v263
      %v442 = vpop.f32.mrb[0].mxu0
      %v443 = vadd.f32 0.0, %v442
      %v444 = vpop.f32.mrb[0].mxu0
      %445 = vmatprep.mubr.f32.mxu0 0.0
      %446 = vmatmul.mubr.f32.gmra.mrb[0].mxu0 %v266
      %v447 = vpop.f32.mrb[0].mxu0
      %v448 = vadd.f32 0.0, %v447
      %v449 = vpop.f32.mrb[0].mxu0
      %450 = vmatprep.mubr.f32.mxu0 0.0
      %451 = vmatmul.mubr.f32.gmra.mrb[0].mxu0 %v269
      %v452 = vpop.f32.mrb[0].mxu0
      %v453 = vadd.f32 0.0, %v452
      %v454 = vpop.f32.mrb[0].mxu0
      %455 = vmatprep.mubr.f32.mxu0 0.0
      %456 = vmatmul.mubr.f32.gmra.mrb[0].mxu0 %v272
      %v457 = vpop.f32.mrb[0].mxu0
      %v458 = vadd.f32 0.0, %v457
      %v459 = vpop.f32.mrb[0].mxu0
      %460 = vmatprep.mubr.f32.mxu0 0.0
      %461 = vmatmul.mubr.f32.gmra.mrb[0].mxu0 %v275
      %v462 = vpop.f32.mrb[0].mxu0
      %v463 = vadd.f32 0.0, %v462
      %v464 = vpop.f32.mrb[0].mxu0
      %465 = vmatprep.mubr.f32.mxu0 0.0
      %466 = vmatmul.mubr.f32.gmra.mrb[0].mxu0 %v278
      %v467 = vpop.f32.mrb[0].mxu0
      %v468 = vadd.f32 0.0, %v467
      %v469 = vpop.f32.mrb[0].mxu0
      %470 = vmatprep.mubr.f32.mxu0 0.0
      %471 = vmatmul.mubr.f32.gmra.mrb[0].mxu0 %v281
      %v472 = vpop.f32.mrb[0].mxu0
      %v473 = vadd.f32 0.0, %v472
      %v474 = vpop.f32.mrb[0].mxu0
      %475 = vmatprep.mubr.f32.mxu0 0.0
      %476 = vmatmul.mubr.f32.gmra.mrb[0].mxu0 %v284
      %v477 = vpop.f32.mrb[0].mxu0
      %v478 = vadd.f32 0.0, %v477
      %v479 = vpop.f32.mrb[0].mxu0
      %480 = vmatprep.mubr.f32.mxu0 0.0
      %481 = vmatmul.mubr.f32.gmra.mrb[0].mxu0 %v287
      %v482 = vpop.f32.mrb[0].mxu0
      %v483 = vadd.f32 0.0, %v482
      %v484 = vpop.f32.mrb[0].mxu0
      %485 = vmatprep.mubr.f32.mxu0 0.0
      %486 = vmatmul.mubr.f32.gmra.mrb[0].mxu0 %v290
      %v487 = vpop.f32.mrb[0].mxu0
      %v488 = vadd.f32 0.0, %v487
      %v489 = vpop.f32.mrb[0].mxu0
      %490 = vmatprep.mubr.f32.mxu0 0.0
      %491 = vmatmul.mubr.f32.gmra.mrb[0].mxu0 %v293
      %v492 = vpop.f32.mrb[0].mxu0
      %v493 = vadd.f32 0.0, %v492
      %v494 = vpop.f32.mrb[0].mxu0
      %495 = vmatprep.mubr.f32.mxu0 0.0
      %496 = vmatmul.mubr.f32.gmra.mrb[0].mxu0 %v296
      %v497 = vpop.f32.mrb[0].mxu0
      %v498 = vadd.f32 0.0, %v497
      %v499 = vpop.f32.mrb[0].mxu0
      %500 = vmatprep.mubr.f32.mxu0 0.0
      %501 = vmatmul.mubr.f32.gmra.mrb[0].mxu0 %v299
      %v502 = vpop.f32.mrb[0].mxu0
      %v503 = vadd.f32 0.0, %v502
      %v504 = vpop.f32.mrb[0].mxu0
      %505 = vmatprep.mubr.f32.mxu0 0.0
      %506 = vmatmul.mubr.f32.gmra.mrb[0].mxu0 %v302
      %v507 = vpop.f32.mrb[0].mxu0
      %v508 = vadd.f32 0.0, %v507
      %v509 = vpop.f32.mrb[0].mxu0
      %510 = vmatprep.mubr.f32.mxu0 0.0
      %511 = vmatmul.mubr.f32.gmra.mrb[0].mxu0 %v305
      %v512 = vpop.f32.mrb[0].mxu0
      %v513 = vadd.f32 0.0, %v512
      %v514 = vpop.f32.mrb[0].mxu0
      %515 = vmatprep.mubr.f32.mxu0 0.0
      %516 = vmatmul.mubr.f32.gmra.mrb[0].mxu0 %v308
      %v517 = vpop.f32.mrb[0].mxu0
      %v518 = vadd.f32 0.0, %v517
      %v519 = vpop.f32.mrb[0].mxu0
      %520 = vmatprep.mubr.f32.mxu0 0.0
      %521 = vmatmul.mubr.f32.gmra.mrb[0].mxu0 %v311
      %v522 = vpop.f32.mrb[0].mxu0
      %v523 = vadd.f32 0.0, %v522
      %v524 = vpop.f32.mrb[0].mxu0
      %525 = vmatprep.mubr.f32.mxu0 0.0
      %526 = vmatmul.mubr.f32.gmra.mrb[0].mxu0 %v314
      %v527 = vpop.f32.mrb[0].mxu0
      %v528 = vadd.f32 0.0, %v527
      %v529 = vpop.f32.mrb[0].mxu0
      %530 = vmatprep.mubr.f32.mxu0 0.0
      %531 = vmatmul.mubr.f32.gmra.mrb[0].mxu0 %v317
      %v532 = vpop.f32.mrb[0].mxu0
      %v533 = vadd.f32 0.0, %v532
      %v534 = vpop.f32.mrb[0].mxu0
      %535 = vmatprep.mubr.f32.mxu0 0.0
      %536 = vmatmul.mubr.f32.gmra.mrb[0].mxu0 %v320
      %v537 = vpop.f32.mrb[0].mxu0
      %v538 = vadd.f32 0.0, %v537
      %v539 = vpop.f32.mrb[0].mxu0
      %540 = vmatprep.mubr.f32.mxu0 0.0
      %541 = vmatmul.mubr.f32.gmra.mrb[0].mxu0 %v323
      %v542 = vpop.f32.mrb[0].mxu0
      %v543 = vadd.f32 0.0, %v542
      %v544 = vpop.f32.mrb[0].mxu0
      %545 = vmatprep.mubr.f32.mxu0 0.0
      %546 = vmatmul.mubr.f32.gmra.mrb[0].mxu0 %v326
      %v547 = vpop.f32.mrb[0].mxu0
      %v548 = vadd.f32 0.0, %v547
      %v549 = vpop.f32.mrb[0].mxu0
      %550 = vmatprep.mubr.f32.mxu0 0.0
      %551 = vmatmul.mubr.f32.gmra.mrb[0].mxu0 %v329
      %v552 = vpop.f32.mrb[0].mxu0
      %v553 = vadd.f32 0.0, %v552
      %v554 = vpop.f32.mrb[0].mxu0
      %555 = vmatprep.mubr.f32.mxu0 0.0
      %556 = vmatmul.mubr.f32.gmra.mrb[0].mxu0 %v332
      %v557 = vpop.f32.mrb[0].mxu0
      %v558 = vadd.f32 0.0, %v557
      %v559 = vpop.f32.mrb[0].mxu0
      %560 = vmatprep.mubr.f32.mxu0 0.0
      %561 = vmatmul.mubr.f32.gmra.mrb[0].mxu0 %v335
      %v562 = vpop.f32.mrb[0].mxu0
      %v563 = vadd.f32 0.0, %v562
      %v564 = vpop.f32.mrb[0].mxu0
      %565 = vdwg.mxu0
      %v567 = vsel %vm240, %v199, 0
      %v570 = vsel %vm240, %v200, 0
      %v573 = vsel %vm337, %v236, 0
      %575 = vmatprep.subr.mxu0 0.0
      %576 = vmatpush1.msra.mxu0 %v235
      %577 = vmatprep.subr.mxu0 0.0
      %578 = vmatpush1.msra.mxu0 %v573
      %579 = vmatprep.subr.mxu0 0.0
      %580 = vmatpush1.msra.mxu0 0.0
      %581 = vmatprep.subr.mxu0 0.0
      %582 = vmatpush1.msra.mxu0 0.0
      %583 = vmatprep.subr.mxu0 0.0
      %584 = vmatpush1.msra.mxu0 0.0
      %585 = vmatprep.subr.mxu0 0.0
      %586 = vmatpush1.msra.mxu0 0.0
      %587 = vmatprep.subr.mxu0 0.0
      %588 = vmatpush1.msra.mxu0 0.0
      %589 = vmatprep.subr.mxu0 0.0
      %590 = vmatpush1.msra.mxu0 0.0
      %591 = vmatprep.subr.mxu0 0.0
      %592 = vmatpush1.msra.mxu0 0.0
      %593 = vmatprep.subr.mxu0 0.0
      %594 = vmatpush1.msra.mxu0 0.0
      %595 = vmatprep.subr.mxu0 0.0
      %596 = vmatpush1.msra.mxu0 0.0
      %597 = vmatprep.subr.mxu0 0.0
      %598 = vmatpush1.msra.mxu0 0.0
      %599 = vmatprep.subr.mxu0 0.0
      %600 = vmatpush1.msra.mxu0 0.0
      %601 = vmatprep.subr.mxu0 0.0
      %602 = vmatpush1.msra.mxu0 0.0
      %603 = vmatprep.subr.mxu0 0.0
      %604 = vmatpush1.msra.mxu0 0.0
      %605 = vmatprep.subr.mxu0 0.0
      %606 = vmatpush1.msra.mxu0 0.0
      %607 = vmatprep.subr.mxu0 0.0
      %608 = vmatpush1.msra.mxu0 0.0
      %609 = vmatprep.subr.mxu0 0.0
      %610 = vmatpush1.msra.mxu0 0.0
      %611 = vmatprep.subr.mxu0 0.0
      %612 = vmatpush1.msra.mxu0 0.0
      %613 = vmatprep.subr.mxu0 0.0
      %614 = vmatpush1.msra.mxu0 0.0
      %615 = vmatprep.subr.mxu0 0.0
      %616 = vmatpush1.msra.mxu0 0.0
      %617 = vmatprep.subr.mxu0 0.0
      %618 = vmatpush1.msra.mxu0 0.0
      %619 = vmatprep.subr.mxu0 0.0
      %620 = vmatpush1.msra.mxu0 0.0
      %621 = vmatprep.subr.mxu0 0.0
      %622 = vmatpush1.msra.mxu0 0.0
      %623 = vmatprep.subr.mxu0 0.0
      %624 = vmatpush1.msra.mxu0 0.0
      %625 = vmatprep.subr.mxu0 0.0
      %626 = vmatpush1.msra.mxu0 0.0
      %627 = vmatprep.subr.mxu0 0.0
      %628 = vmatpush1.msra.mxu0 0.0
      %629 = vmatprep.subr.mxu0 0.0
      %630 = vmatpush1.msra.mxu0 0.0
      %631 = vmatprep.subr.mxu0 0.0
      %632 = vmatpush1.msra.mxu0 0.0
      %633 = vmatprep.subr.mxu0 0.0
      %634 = vmatpush1.msra.mxu0 0.0
      %635 = vmatprep.subr.mxu0 0.0
      %636 = vmatpush1.msra.mxu0 0.0
      %637 = vmatprep.subr.mxu0 0.0
      %638 = vmatpush1.msra.mxu0 0.0
      %639 = vmatprep.mubr.f32.mxu0 0.0
      %640 = vmatmul.mubr.f32.gmra.mrb[0].mxu0 %v567
      %v641 = vpop.f32.mrb[0].mxu0
      %v642 = vadd.f32 %v408, %v641
      %v643 = vpop.f32.mrb[0].mxu0
      %644 = vmatprep.mubr.f32.mxu0 0.0
      %645 = vmatmul.mubr.f32.gmra.mrb[0].mxu0 %v570
      %v646 = vpop.f32.mrb[0].mxu0
      %v647 = vadd.f32 %v413, %v646
      %v648 = vpop.f32.mrb[0].mxu0
      %649 = vmatprep.mubr.f32.mxu0 0.0
      %650 = vmatmul.mubr.f32.gmra.mrb[0].mxu0 %v242
      %v651 = vpop.f32.mrb[0].mxu0
      %v652 = vadd.f32 %v418, %v651
      %v653 = vpop.f32.mrb[0].mxu0
      %654 = vmatprep.mubr.f32.mxu0 0.0
      %655 = vmatmul.mubr.f32.gmra.mrb[0].mxu0 %v245
      %v656 = vpop.f32.mrb[0].mxu0
      %v657 = vadd.f32 %v423, %v656
      %v658 = vpop.f32.mrb[0].mxu0
      %659 = vmatprep.mubr.f32.mxu0 0.0
      %660 = vmatmul.mubr.f32.gmra.mrb[0].mxu0 %v248
      %v661 = vpop.f32.mrb[0].mxu0
      %v662 = vadd.f32 %v428, %v661
      %v663 = vpop.f32.mrb[0].mxu0
      %664 = vmatprep.mubr.f32.mxu0 0.0
      %665 = vmatmul.mubr.f32.gmra.mrb[0].mxu0 %v251
      %v666 = vpop.f32.mrb[0].mxu0
      %v667 = vadd.f32 %v433, %v666
      %v668 = vpop.f32.mrb[0].mxu0
      %669 = vmatprep.mubr.f32.mxu0 0.0
      %670 = vmatmul.mubr.f32.gmra.mrb[0].mxu0 %v254
      %v671 = vpop.f32.mrb[0].mxu0
      %v672 = vadd.f32 %v438, %v671
      %v673 = vpop.f32.mrb[0].mxu0
      %674 = vmatprep.mubr.f32.mxu0 0.0
      %675 = vmatmul.mubr.f32.gmra.mrb[0].mxu0 %v257
      %v676 = vpop.f32.mrb[0].mxu0
      %v677 = vadd.f32 %v443, %v676
      %v678 = vpop.f32.mrb[0].mxu0
      %679 = vmatprep.mubr.f32.mxu0 0.0
      %680 = vmatmul.mubr.f32.gmra.mrb[0].mxu0 %v260
      %v681 = vpop.f32.mrb[0].mxu0
      %v682 = vadd.f32 %v448, %v681
      %v683 = vpop.f32.mrb[0].mxu0
      %684 = vmatprep.mubr.f32.mxu0 0.0
      %685 = vmatmul.mubr.f32.gmra.mrb[0].mxu0 %v263
      %v686 = vpop.f32.mrb[0].mxu0
      %v687 = vadd.f32 %v453, %v686
      %v688 = vpop.f32.mrb[0].mxu0
      %689 = vmatprep.mubr.f32.mxu0 0.0
      %690 = vmatmul.mubr.f32.gmra.mrb[0].mxu0 %v266
      %v691 = vpop.f32.mrb[0].mxu0
      %v692 = vadd.f32 %v458, %v691
      %v693 = vpop.f32.mrb[0].mxu0
      %694 = vmatprep.mubr.f32.mxu0 0.0
      %695 = vmatmul.mubr.f32.gmra.mrb[0].mxu0 %v269
      %v696 = vpop.f32.mrb[0].mxu0
      %v697 = vadd.f32 %v463, %v696
      %v698 = vpop.f32.mrb[0].mxu0
      %699 = vmatprep.mubr.f32.mxu0 0.0
      %700 = vmatmul.mubr.f32.gmra.mrb[0].mxu0 %v272
      %v701 = vpop.f32.mrb[0].mxu0
      %v702 = vadd.f32 %v468, %v701
      %v703 = vpop.f32.mrb[0].mxu0
      %704 = vmatprep.mubr.f32.mxu0 0.0
      %705 = vmatmul.mubr.f32.gmra.mrb[0].mxu0 %v275
      %v706 = vpop.f32.mrb[0].mxu0
      %v707 = vadd.f32 %v473, %v706
      %v708 = vpop.f32.mrb[0].mxu0
      %709 = vmatprep.mubr.f32.mxu0 0.0
      %710 = vmatmul.mubr.f32.gmra.mrb[0].mxu0 %v278
      %v711 = vpop.f32.mrb[0].mxu0
      %v712 = vadd.f32 %v478, %v711
      %v713 = vpop.f32.mrb[0].mxu0
      %714 = vmatprep.mubr.f32.mxu0 0.0
      %715 = vmatmul.mubr.f32.gmra.mrb[0].mxu0 %v281
      %v716 = vpop.f32.mrb[0].mxu0
      %v717 = vadd.f32 %v483, %v716
      %v718 = vpop.f32.mrb[0].mxu0
      %719 = vmatprep.mubr.f32.mxu0 0.0
      %720 = vmatmul.mubr.f32.gmra.mrb[0].mxu0 %v284
      %v721 = vpop.f32.mrb[0].mxu0
      %v722 = vadd.f32 %v488, %v721
      %v723 = vpop.f32.mrb[0].mxu0
      %724 = vmatprep.mubr.f32.mxu0 0.0
      %725 = vmatmul.mubr.f32.gmra.mrb[0].mxu0 %v287
      %v726 = vpop.f32.mrb[0].mxu0
      %v727 = vadd.f32 %v493, %v726
      %v728 = vpop.f32.mrb[0].mxu0
      %729 = vmatprep.mubr.f32.mxu0 0.0
      %730 = vmatmul.mubr.f32.gmra.mrb[0].mxu0 %v290
      %v731 = vpop.f32.mrb[0].mxu0
      %v732 = vadd.f32 %v498, %v731
      %v733 = vpop.f32.mrb[0].mxu0
      %734 = vmatprep.mubr.f32.mxu0 0.0
      %735 = vmatmul.mubr.f32.gmra.mrb[0].mxu0 %v293
      %v736 = vpop.f32.mrb[0].mxu0
      %v737 = vadd.f32 %v503, %v736
      %v738 = vpop.f32.mrb[0].mxu0
      %739 = vmatprep.mubr.f32.mxu0 0.0
      %740 = vmatmul.mubr.f32.gmra.mrb[0].mxu0 %v296
      %v741 = vpop.f32.mrb[0].mxu0
      %v742 = vadd.f32 %v508, %v741
      %v743 = vpop.f32.mrb[0].mxu0
      %744 = vmatprep.mubr.f32.mxu0 0.0
      %745 = vmatmul.mubr.f32.gmra.mrb[0].mxu0 %v299
      %v746 = vpop.f32.mrb[0].mxu0
      %v747 = vadd.f32 %v513, %v746
      %v748 = vpop.f32.mrb[0].mxu0
      %749 = vmatprep.mubr.f32.mxu0 0.0
      %750 = vmatmul.mubr.f32.gmra.mrb[0].mxu0 %v302
      %v751 = vpop.f32.mrb[0].mxu0
      %v752 = vadd.f32 %v518, %v751
      %v753 = vpop.f32.mrb[0].mxu0
      %754 = vmatprep.mubr.f32.mxu0 0.0
      %755 = vmatmul.mubr.f32.gmra.mrb[0].mxu0 %v305
      %v756 = vpop.f32.mrb[0].mxu0
      %v757 = vadd.f32 %v523, %v756
      %v758 = vpop.f32.mrb[0].mxu0
      %759 = vmatprep.mubr.f32.mxu0 0.0
      %760 = vmatmul.mubr.f32.gmra.mrb[0].mxu0 %v308
      %v761 = vpop.f32.mrb[0].mxu0
      %v762 = vadd.f32 %v528, %v761
      %v763 = vpop.f32.mrb[0].mxu0
      %764 = vmatprep.mubr.f32.mxu0 0.0
      %765 = vmatmul.mubr.f32.gmra.mrb[0].mxu0 %v311
      %v766 = vpop.f32.mrb[0].mxu0
      %v767 = vadd.f32 %v533, %v766
      %v768 = vpop.f32.mrb[0].mxu0
      %769 = vmatprep.mubr.f32.mxu0 0.0
      %770 = vmatmul.mubr.f32.gmra.mrb[0].mxu0 %v314
      %v771 = vpop.f32.mrb[0].mxu0
      %v772 = vadd.f32 %v538, %v771
      %v773 = vpop.f32.mrb[0].mxu0
      %774 = vmatprep.mubr.f32.mxu0 0.0
      %775 = vmatmul.mubr.f32.gmra.mrb[0].mxu0 %v317
      %v776 = vpop.f32.mrb[0].mxu0
      %v777 = vadd.f32 %v543, %v776
      %v778 = vpop.f32.mrb[0].mxu0
      %779 = vmatprep.mubr.f32.mxu0 0.0
      %780 = vmatmul.mubr.f32.gmra.mrb[0].mxu0 %v320
      %v781 = vpop.f32.mrb[0].mxu0
      %v782 = vadd.f32 %v548, %v781
      %v783 = vpop.f32.mrb[0].mxu0
      %784 = vmatprep.mubr.f32.mxu0 0.0
      %785 = vmatmul.mubr.f32.gmra.mrb[0].mxu0 %v323
      %v786 = vpop.f32.mrb[0].mxu0
      %v787 = vadd.f32 %v553, %v786
      %v788 = vpop.f32.mrb[0].mxu0
      %789 = vmatprep.mubr.f32.mxu0 0.0
      %790 = vmatmul.mubr.f32.gmra.mrb[0].mxu0 %v326
      %v791 = vpop.f32.mrb[0].mxu0
      %v792 = vadd.f32 %v558, %v791
      %v793 = vpop.f32.mrb[0].mxu0
      %794 = vmatprep.mubr.f32.mxu0 0.0
      %795 = vmatmul.mubr.f32.gmra.mrb[0].mxu0 %v329
      %v796 = vpop.f32.mrb[0].mxu0
      %v797 = vadd.f32 %v563, %v796
      %v798 = vpop.f32.mrb[0].mxu0
      %799 = vdwg.mxu0
      %s800 = scalar_lea.vmem %s1, 32
      %v801 = vld [vmem:[%s800] sm:$0xff]
      %v802 = vld [vmem:[%s800 + $0x8] sm:$0xf]
      %v804 = vsel %vm240, %v233, 0
      %v807 = vsel %vm240, %v234, 0
      %v810 = vsel %vm337, %v802, 0
      %812 = vmatprep.subr.mxu0 0.0
      %813 = vmatpush1.msra.mxu0 %v801
      %814 = vmatprep.subr.mxu0 0.0
      %815 = vmatpush1.msra.mxu0 %v810
      %816 = vmatprep.subr.mxu0 0.0
      %817 = vmatpush1.msra.mxu0 0.0
      %818 = vmatprep.subr.mxu0 0.0
      %819 = vmatpush1.msra.mxu0 0.0
      %820 = vmatprep.subr.mxu0 0.0
      %821 = vmatpush1.msra.mxu0 0.0
      %822 = vmatprep.subr.mxu0 0.0
      %823 = vmatpush1.msra.mxu0 0.0
      %824 = vmatprep.subr.mxu0 0.0
      %825 = vmatpush1.msra.mxu0 0.0
      %826 = vmatprep.subr.mxu0 0.0
      %827 = vmatpush1.msra.mxu0 0.0
      %828 = vmatprep.subr.mxu0 0.0
      %829 = vmatpush1.msra.mxu0 0.0
      %830 = vmatprep.subr.mxu0 0.0
      %831 = vmatpush1.msra.mxu0 0.0
      %832 = vmatprep.subr.mxu0 0.0
      %833 = vmatpush1.msra.mxu0 0.0
      %834 = vmatprep.subr.mxu0 0.0
      %835 = vmatpush1.msra.mxu0 0.0
      %836 = vmatprep.subr.mxu0 0.0
      %837 = vmatpush1.msra.mxu0 0.0
      %838 = vmatprep.subr.mxu0 0.0
      %839 = vmatpush1.msra.mxu0 0.0
      %840 = vmatprep.subr.mxu0 0.0
      %841 = vmatpush1.msra.mxu0 0.0
      %842 = vmatprep.subr.mxu0 0.0
      %843 = vmatpush1.msra.mxu0 0.0
      %844 = vmatprep.subr.mxu0 0.0
      %845 = vmatpush1.msra.mxu0 0.0
      %846 = vmatprep.subr.mxu0 0.0
      %847 = vmatpush1.msra.mxu0 0.0
      %848 = vmatprep.subr.mxu0 0.0
      %849 = vmatpush1.msra.mxu0 0.0
      %850 = vmatprep.subr.mxu0 0.0
      %851 = vmatpush1.msra.mxu0 0.0
      %852 = vmatprep.subr.mxu0 0.0
      %853 = vmatpush1.msra.mxu0 0.0
      %854 = vmatprep.subr.mxu0 0.0
      %855 = vmatpush1.msra.mxu0 0.0
      %856 = vmatprep.subr.mxu0 0.0
      %857 = vmatpush1.msra.mxu0 0.0
      %858 = vmatprep.subr.mxu0 0.0
      %859 = vmatpush1.msra.mxu0 0.0
      %860 = vmatprep.subr.mxu0 0.0
      %861 = vmatpush1.msra.mxu0 0.0
      %862 = vmatprep.subr.mxu0 0.0
      %863 = vmatpush1.msra.mxu0 0.0
      %864 = vmatprep.subr.mxu0 0.0
      %865 = vmatpush1.msra.mxu0 0.0
      %866 = vmatprep.subr.mxu0 0.0
      %867 = vmatpush1.msra.mxu0 0.0
      %868 = vmatprep.subr.mxu0 0.0
      %869 = vmatpush1.msra.mxu0 0.0
      %870 = vmatprep.subr.mxu0 0.0
      %871 = vmatpush1.msra.mxu0 0.0
      %872 = vmatprep.subr.mxu0 0.0
      %873 = vmatpush1.msra.mxu0 0.0
      %874 = vmatprep.subr.mxu0 0.0
      %875 = vmatpush1.msra.mxu0 0.0
      %876 = vmatprep.mubr.f32.mxu0 0.0
      %877 = vmatmul.mubr.f32.gmra.mrb[0].mxu0 %v248
      %v878 = vpop.f32.mrb[0].mxu0
      %v879 = vadd.f32 0.0, %v878
      %v880 = vpop.f32.mrb[0].mxu0
      %881 = vmatprep.mubr.f32.mxu0 0.0
      %882 = vmatmul.mubr.f32.gmra.mrb[0].mxu0 %v251
      %v883 = vpop.f32.mrb[0].mxu0
      %v884 = vadd.f32 0.0, %v883
      %v885 = vpop.f32.mrb[0].mxu0
      %886 = vmatprep.mubr.f32.mxu0 0.0
      %887 = vmatmul.mubr.f32.gmra.mrb[0].mxu0 %v254
      %v888 = vpop.f32.mrb[0].mxu0
      %v889 = vadd.f32 0.0, %v888
      %v890 = vpop.f32.mrb[0].mxu0
      %891 = vmatprep.mubr.f32.mxu0 0.0
      %892 = vmatmul.mubr.f32.gmra.mrb[0].mxu0 %v257
      %v893 = vpop.f32.mrb[0].mxu0
      %v894 = vadd.f32 0.0, %v893
      %v895 = vpop.f32.mrb[0].mxu0
      %896 = vmatprep.mubr.f32.mxu0 0.0
      %897 = vmatmul.mubr.f32.gmra.mrb[0].mxu0 %v260
      %v898 = vpop.f32.mrb[0].mxu0
      %v899 = vadd.f32 0.0, %v898
      %v900 = vpop.f32.mrb[0].mxu0
      %901 = vmatprep.mubr.f32.mxu0 0.0
      %902 = vmatmul.mubr.f32.gmra.mrb[0].mxu0 %v263
      %v903 = vpop.f32.mrb[0].mxu0
      %v904 = vadd.f32 0.0, %v903
      %v905 = vpop.f32.mrb[0].mxu0
      %906 = vmatprep.mubr.f32.mxu0 0.0
      %907 = vmatmul.mubr.f32.gmra.mrb[0].mxu0 %v266
      %v908 = vpop.f32.mrb[0].mxu0
      %v909 = vadd.f32 0.0, %v908
      %v910 = vpop.f32.mrb[0].mxu0
      %911 = vmatprep.mubr.f32.mxu0 0.0
      %912 = vmatmul.mubr.f32.gmra.mrb[0].mxu0 %v269
      %v913 = vpop.f32.mrb[0].mxu0
      %v914 = vadd.f32 0.0, %v913
      %v915 = vpop.f32.mrb[0].mxu0
      %916 = vmatprep.mubr.f32.mxu0 0.0
      %917 = vmatmul.mubr.f32.gmra.mrb[0].mxu0 %v272
      %v918 = vpop.f32.mrb[0].mxu0
      %v919 = vadd.f32 0.0, %v918
      %v920 = vpop.f32.mrb[0].mxu0
      %921 = vmatprep.mubr.f32.mxu0 0.0
      %922 = vmatmul.mubr.f32.gmra.mrb[0].mxu0 %v275
      %v923 = vpop.f32.mrb[0].mxu0
      %v924 = vadd.f32 0.0, %v923
      %v925 = vpop.f32.mrb[0].mxu0
      %926 = vmatprep.mubr.f32.mxu0 0.0
      %927 = vmatmul.mubr.f32.gmra.mrb[0].mxu0 %v278
      %v928 = vpop.f32.mrb[0].mxu0
      %v929 = vadd.f32 0.0, %v928
      %v930 = vpop.f32.mrb[0].mxu0
      %931 = vmatprep.mubr.f32.mxu0 0.0
      %932 = vmatmul.mubr.f32.gmra.mrb[0].mxu0 %v281
      %v933 = vpop.f32.mrb[0].mxu0
      %v934 = vadd.f32 0.0, %v933
      %v935 = vpop.f32.mrb[0].mxu0
      %936 = vmatprep.mubr.f32.mxu0 0.0
      %937 = vmatmul.mubr.f32.gmra.mrb[0].mxu0 %v284
      %v938 = vpop.f32.mrb[0].mxu0
      %v939 = vadd.f32 0.0, %v938
      %v940 = vpop.f32.mrb[0].mxu0
      %941 = vmatprep.mubr.f32.mxu0 0.0
      %942 = vmatmul.mubr.f32.gmra.mrb[0].mxu0 %v287
      %v943 = vpop.f32.mrb[0].mxu0
      %v944 = vadd.f32 0.0, %v943
      %v945 = vpop.f32.mrb[0].mxu0
      %946 = vmatprep.mubr.f32.mxu0 0.0
      %947 = vmatmul.mubr.f32.gmra.mrb[0].mxu0 %v290
      %v948 = vpop.f32.mrb[0].mxu0
      %v949 = vadd.f32 0.0, %v948
      %v950 = vpop.f32.mrb[0].mxu0
      %951 = vmatprep.mubr.f32.mxu0 0.0
      %952 = vmatmul.mubr.f32.gmra.mrb[0].mxu0 %v293
      %v953 = vpop.f32.mrb[0].mxu0
      %v954 = vadd.f32 0.0, %v953
      %v955 = vpop.f32.mrb[0].mxu0
      %956 = vmatprep.mubr.f32.mxu0 0.0
      %957 = vmatmul.mubr.f32.gmra.mrb[0].mxu0 %v296
      %v958 = vpop.f32.mrb[0].mxu0
      %v959 = vadd.f32 0.0, %v958
      %v960 = vpop.f32.mrb[0].mxu0
      %961 = vmatprep.mubr.f32.mxu0 0.0
      %962 = vmatmul.mubr.f32.gmra.mrb[0].mxu0 %v299
      %v963 = vpop.f32.mrb[0].mxu0
      %v964 = vadd.f32 0.0, %v963
      %v965 = vpop.f32.mrb[0].mxu0
      %966 = vmatprep.mubr.f32.mxu0 0.0
      %967 = vmatmul.mubr.f32.gmra.mrb[0].mxu0 %v302
      %v968 = vpop.f32.mrb[0].mxu0
      %v969 = vadd.f32 0.0, %v968
      %v970 = vpop.f32.mrb[0].mxu0
      %971 = vmatprep.mubr.f32.mxu0 0.0
      %972 = vmatmul.mubr.f32.gmra.mrb[0].mxu0 %v305
      %v973 = vpop.f32.mrb[0].mxu0
      %v974 = vadd.f32 0.0, %v973
      %v975 = vpop.f32.mrb[0].mxu0
      %976 = vmatprep.mubr.f32.mxu0 0.0
      %977 = vmatmul.mubr.f32.gmra.mrb[0].mxu0 %v308
      %v978 = vpop.f32.mrb[0].mxu0
      %v979 = vadd.f32 0.0, %v978
      %v980 = vpop.f32.mrb[0].mxu0
      %981 = vmatprep.mubr.f32.mxu0 0.0
      %982 = vmatmul.mubr.f32.gmra.mrb[0].mxu0 %v311
      %v983 = vpop.f32.mrb[0].mxu0
      %v984 = vadd.f32 0.0, %v983
      %v985 = vpop.f32.mrb[0].mxu0
      %986 = vmatprep.mubr.f32.mxu0 0.0
      %987 = vmatmul.mubr.f32.gmra.mrb[0].mxu0 %v314
      %v988 = vpop.f32.mrb[0].mxu0
      %v989 = vadd.f32 0.0, %v988
      %v990 = vpop.f32.mrb[0].mxu0
      %991 = vmatprep.mubr.f32.mxu0 0.0
      %992 = vmatmul.mubr.f32.gmra.mrb[0].mxu0 %v317
      %v993 = vpop.f32.mrb[0].mxu0
      %v994 = vadd.f32 0.0, %v993
      %v995 = vpop.f32.mrb[0].mxu0
      %996 = vmatprep.mubr.f32.mxu0 0.0
      %997 = vmatmul.mubr.f32.gmra.mrb[0].mxu0 %v320
      %v998 = vpop.f32.mrb[0].mxu0
      %v999 = vadd.f32 0.0, %v998
      %v1000 = vpop.f32.mrb[0].mxu0
      %1001 = vmatprep.mubr.f32.mxu0 0.0
      %1002 = vmatmul.mubr.f32.gmra.mrb[0].mxu0 %v323
      %v1003 = vpop.f32.mrb[0].mxu0
      %v1004 = vadd.f32 0.0, %v1003
      %v1005 = vpop.f32.mrb[0].mxu0
      %1006 = vmatprep.mubr.f32.mxu0 0.0
      %1007 = vmatmul.mubr.f32.gmra.mrb[0].mxu0 %v326
      %v1008 = vpop.f32.mrb[0].mxu0
      %v1009 = vadd.f32 0.0, %v1008
      %v1010 = vpop.f32.mrb[0].mxu0
      %1011 = vmatprep.mubr.f32.mxu0 0.0
      %1012 = vmatmul.mubr.f32.gmra.mrb[0].mxu0 %v329
      %v1013 = vpop.f32.mrb[0].mxu0
      %v1014 = vadd.f32 0.0, %v1013
      %v1015 = vpop.f32.mrb[0].mxu0
      %1016 = vmatprep.mubr.f32.mxu0 0.0
      %1017 = vmatmul.mubr.f32.gmra.mrb[0].mxu0 %v332
      %v1018 = vpop.f32.mrb[0].mxu0
      %v1019 = vadd.f32 0.0, %v1018
      %v1020 = vpop.f32.mrb[0].mxu0
      %1021 = vmatprep.mubr.f32.mxu0 0.0
      %1022 = vmatmul.mubr.f32.gmra.mrb[0].mxu0 %v335
      %v1023 = vpop.f32.mrb[0].mxu0
      %v1024 = vadd.f32 0.0, %v1023
      %v1025 = vpop.f32.mrb[0].mxu0
      %1026 = vmatprep.mubr.f32.mxu0 0.0
      %1027 = vmatmul.mubr.f32.gmra.mrb[0].mxu0 %v804
      %v1028 = vpop.f32.mrb[0].mxu0
      %v1029 = vadd.f32 0.0, %v1028
      %v1030 = vpop.f32.mrb[0].mxu0
      %1031 = vmatprep.mubr.f32.mxu0 0.0
      %1032 = vmatmul.mubr.f32.gmra.mrb[0].mxu0 %v807
      %v1033 = vpop.f32.mrb[0].mxu0
      %v1034 = vadd.f32 0.0, %v1033
      %v1035 = vpop.f32.mrb[0].mxu0
      %1036 = vdwg.mxu0
      %v1037 = vadd.f32 %v642, %v879
      %v1038 = vadd.f32 %v647, %v884
      %v1039 = vadd.f32 %v652, %v889
      %v1040 = vadd.f32 %v657, %v894
      %v1041 = vadd.f32 %v662, %v899
      %v1042 = vadd.f32 %v667, %v904
      %v1043 = vadd.f32 %v672, %v909
      %v1044 = vadd.f32 %v677, %v914
      %v1045 = vadd.f32 %v682, %v919
      %v1046 = vadd.f32 %v687, %v924
      %v1047 = vadd.f32 %v692, %v929
      %v1048 = vadd.f32 %v697, %v934
      %v1049 = vadd.f32 %v702, %v939
      %v1050 = vadd.f32 %v707, %v944
      %v1051 = vadd.f32 %v712, %v949
      %v1052 = vadd.f32 %v717, %v954
      %v1053 = vadd.f32 %v722, %v959
      %v1054 = vadd.f32 %v727, %v964
      %v1055 = vadd.f32 %v732, %v969
      %v1056 = vadd.f32 %v737, %v974
      %v1057 = vadd.f32 %v742, %v979
      %v1058 = vadd.f32 %v747, %v984
      %v1059 = vadd.f32 %v752, %v989
      %v1060 = vadd.f32 %v757, %v994
      %v1061 = vadd.f32 %v762, %v999
      %v1062 = vadd.f32 %v767, %v1004
      %v1063 = vadd.f32 %v772, %v1009
      %v1064 = vadd.f32 %v777, %v1014
      %v1065 = vadd.f32 %v782, %v1019
      %v1066 = vadd.f32 %v787, %v1024
      %v1067 = vadd.f32 %v792, %v1029
      %v1068 = vadd.f32 %v797, %v1034
      %v1069 = vld [vmem:[%s2] sm:$0x1]
      %v1071 = vlaneseq
      %v1072 = vshrl.u32 %v1071, 7
      %v1073 = vsub.s32 0, %v1072
      %v1074 = vrot.slane %v1069, %v1073
      %v1076 = vmul.f32 %v1037, %v1074
      %v1077 = vmul.f32 %v1038, %v1074
      %v1078 = vmul.f32 %v1039, %v1074
      %v1079 = vmul.f32 %v1040, %v1074
      %v1080 = vmul.f32 %v1041, %v1074
      %v1081 = vmul.f32 %v1042, %v1074
      %v1082 = vmul.f32 %v1043, %v1074
      %v1083 = vmul.f32 %v1044, %v1074
      %v1084 = vmul.f32 %v1045, %v1074
      %v1085 = vmul.f32 %v1046, %v1074
      %v1086 = vmul.f32 %v1047, %v1074
      %v1087 = vmul.f32 %v1048, %v1074
      %v1088 = vmul.f32 %v1049, %v1074
      %v1089 = vmul.f32 %v1050, %v1074
      %v1090 = vmul.f32 %v1051, %v1074
      %v1091 = vmul.f32 %v1052, %v1074
      %v1092 = vmul.f32 %v1053, %v1074
      %v1093 = vmul.f32 %v1054, %v1074
      %v1094 = vmul.f32 %v1055, %v1074
      %v1095 = vmul.f32 %v1056, %v1074
      %v1096 = vmul.f32 %v1057, %v1074
      %v1097 = vmul.f32 %v1058, %v1074
      %v1098 = vmul.f32 %v1059, %v1074
      %v1099 = vmul.f32 %v1060, %v1074
      %v1100 = vmul.f32 %v1061, %v1074
      %v1101 = vmul.f32 %v1062, %v1074
      %v1102 = vmul.f32 %v1063, %v1074
      %v1103 = vmul.f32 %v1064, %v1074
      %v1104 = vmul.f32 %v1065, %v1074
      %v1105 = vmul.f32 %v1066, %v1074
      %v1106 = vmul.f32 %v1067, %v1074
      %v1107 = vmul.f32 %v1068, %v1074
      %v1108 = vld [vmem:[%s3] sm:$0x1]
      %v1110 = vlaneseq
      %v1111 = vshrl.u32 %v1110, 7
      %v1112 = vsub.s32 0, %v1111
      %v1113 = vrot.slane %v1108, %v1112
      %v1115 = vadd.f32 %v1076, %v1113
      %v1116 = vadd.f32 %v1077, %v1113
      %v1117 = vadd.f32 %v1078, %v1113
      %v1118 = vadd.f32 %v1079, %v1113
      %v1119 = vadd.f32 %v1080, %v1113
      %v1120 = vadd.f32 %v1081, %v1113
      %v1121 = vadd.f32 %v1082, %v1113
      %v1122 = vadd.f32 %v1083, %v1113
      %v1123 = vadd.f32 %v1084, %v1113
      %v1124 = vadd.f32 %v1085, %v1113
      %v1125 = vadd.f32 %v1086, %v1113
      %v1126 = vadd.f32 %v1087, %v1113
      %v1127 = vadd.f32 %v1088, %v1113
      %v1128 = vadd.f32 %v1089, %v1113
      %v1129 = vadd.f32 %v1090, %v1113
      %v1130 = vadd.f32 %v1091, %v1113
      %v1131 = vadd.f32 %v1092, %v1113
      %v1132 = vadd.f32 %v1093, %v1113
      %v1133 = vadd.f32 %v1094, %v1113
      %v1134 = vadd.f32 %v1095, %v1113
      %v1135 = vadd.f32 %v1096, %v1113
      %v1136 = vadd.f32 %v1097, %v1113
      %v1137 = vadd.f32 %v1098, %v1113
      %v1138 = vadd.f32 %v1099, %v1113
      %v1139 = vadd.f32 %v1100, %v1113
      %v1140 = vadd.f32 %v1101, %v1113
      %v1141 = vadd.f32 %v1102, %v1113
      %v1142 = vadd.f32 %v1103, %v1113
      %v1143 = vadd.f32 %v1104, %v1113
      %v1144 = vadd.f32 %v1105, %v1113
      %v1145 = vadd.f32 %v1106, %v1113
      %v1146 = vadd.f32 %v1107, %v1113
      %v1147 = vmax.f32 %v1115, 0.0
      %v1148 = vmax.f32 %v1116, 0.0
      %v1149 = vmax.f32 %v1117, 0.0
      %v1150 = vmax.f32 %v1118, 0.0
      %v1151 = vmax.f32 %v1119, 0.0
      %v1152 = vmax.f32 %v1120, 0.0
      %v1153 = vmax.f32 %v1121, 0.0
      %v1154 = vmax.f32 %v1122, 0.0
      %v1155 = vmax.f32 %v1123, 0.0
      %v1156 = vmax.f32 %v1124, 0.0
      %v1157 = vmax.f32 %v1125, 0.0
      %v1158 = vmax.f32 %v1126, 0.0
      %v1159 = vmax.f32 %v1127, 0.0
      %v1160 = vmax.f32 %v1128, 0.0
      %v1161 = vmax.f32 %v1129, 0.0
      %v1162 = vmax.f32 %v1130, 0.0
      %v1163 = vmax.f32 %v1131, 0.0
      %v1164 = vmax.f32 %v1132, 0.0
      %v1165 = vmax.f32 %v1133, 0.0
      %v1166 = vmax.f32 %v1134, 0.0
      %v1167 = vmax.f32 %v1135, 0.0
      %v1168 = vmax.f32 %v1136, 0.0
      %v1169 = vmax.f32 %v1137, 0.0
      %v1170 = vmax.f32 %v1138, 0.0
      %v1171 = vmax.f32 %v1139, 0.0
      %v1172 = vmax.f32 %v1140, 0.0
      %v1173 = vmax.f32 %v1141, 0.0
      %v1174 = vmax.f32 %v1142, 0.0
      %v1175 = vmax.f32 %v1143, 0.0
      %v1176 = vmax.f32 %v1144, 0.0
      %v1177 = vmax.f32 %v1145, 0.0
      %v1178 = vmax.f32 %v1146, 0.0
      %1179 = vst [vmem:[#allocation2] sm:$0xff] %v1147
      %1180 = vst [vmem:[#allocation2 + $0x8] sm:$0xff] %v1148
      %1181 = vst [vmem:[#allocation2 + $0x10] sm:$0xff] %v1149
      %1182 = vst [vmem:[#allocation2 + $0x18] sm:$0xff] %v1150
      %1183 = vst [vmem:[#allocation2 + $0x20] sm:$0xff] %v1151
      %1184 = vst [vmem:[#allocation2 + $0x28] sm:$0xff] %v1152
      %1185 = vst [vmem:[#allocation2 + $0x30] sm:$0xff] %v1153
      %1186 = vst [vmem:[#allocation2 + $0x38] sm:$0xff] %v1154
      %1187 = vst [vmem:[#allocation2 + $0x40] sm:$0xff] %v1155
      %1188 = vst [vmem:[#allocation2 + $0x48] sm:$0xff] %v1156
      %1189 = vst [vmem:[#allocation2 + $0x50] sm:$0xff] %v1157
      %1190 = vst [vmem:[#allocation2 + $0x58] sm:$0xff] %v1158
      %1191 = vst [vmem:[#allocation2 + $0x60] sm:$0xff] %v1159
      %1192 = vst [vmem:[#allocation2 + $0x68] sm:$0xff] %v1160
      %1193 = vst [vmem:[#allocation2 + $0x70] sm:$0xff] %v1161
      %1194 = vst [vmem:[#allocation2 + $0x78] sm:$0xff] %v1162
      %1195 = vst [vmem:[#allocation2 + $0x80] sm:$0xff] %v1163
      %1196 = vst [vmem:[#allocation2 + $0x88] sm:$0xff] %v1164
      %1197 = vst [vmem:[#allocation2 + $0x90] sm:$0xff] %v1165
      %1198 = vst [vmem:[#allocation2 + $0x98] sm:$0xff] %v1166
      %1199 = vst [vmem:[#allocation2 + $0xa0] sm:$0xff] %v1167
      %1200 = vst [vmem:[#allocation2 + $0xa8] sm:$0xff] %v1168
      %1201 = vst [vmem:[#allocation2 + $0xb0] sm:$0xff] %v1169
      %1202 = vst [vmem:[#allocation2 + $0xb8] sm:$0xff] %v1170
      %1203 = vst [vmem:[#allocation2 + $0xc0] sm:$0xff] %v1171
      %1204 = vst [vmem:[#allocation2 + $0xc8] sm:$0xff] %v1172
      %1205 = vst [vmem:[#allocation2 + $0xd0] sm:$0xff] %v1173
      %1206 = vst [vmem:[#allocation2 + $0xd8] sm:$0xff] %v1174
      %1207 = vst [vmem:[#allocation2 + $0xe0] sm:$0xff] %v1175
      %1208 = vst [vmem:[#allocation2 + $0xe8] sm:$0xff] %v1176
      %1209 = vst [vmem:[#allocation2 + $0xf0] sm:$0xff] %v1177
      %1210 = vst [vmem:[#allocation2 + $0xf8] sm:$0xff] %v1178
      %v1211 = vld [vmem:[#allocation2] ss:$2 sm:$0xff]
      %s1212 = scalar_lea.vmem [#allocation2], 16
      %v1213 = vld [vmem:[%s1212] ss:$2 sm:$0xff]
      %s1214 = scalar_lea.vmem [#allocation2], 32
      %v1215 = vld [vmem:[%s1214] ss:$2 sm:$0xff]
      %s1216 = scalar_lea.vmem [#allocation2], 48
      %v1217 = vld [vmem:[%s1216] ss:$2 sm:$0xff]
      %s1218 = scalar_lea.vmem [#allocation2], 64
      %v1219 = vld [vmem:[%s1218] ss:$2 sm:$0xff]
      %s1220 = scalar_lea.vmem [#allocation2], 80
      %v1221 = vld [vmem:[%s1220] ss:$2 sm:$0xff]
      %s1222 = scalar_lea.vmem [#allocation2], 96
      %v1223 = vld [vmem:[%s1222] ss:$2 sm:$0xff]
      %s1224 = scalar_lea.vmem [#allocation2], 112
      %v1225 = vld [vmem:[%s1224] ss:$2 sm:$0xff]
      %s1226 = scalar_lea.vmem [#allocation2], 128
      %v1227 = vld [vmem:[%s1226] ss:$2 sm:$0xff]
      %s1228 = scalar_lea.vmem [#allocation2], 144
      %v1229 = vld [vmem:[%s1228] ss:$2 sm:$0xff]
      %s1230 = scalar_lea.vmem [#allocation2], 160
      %v1231 = vld [vmem:[%s1230] ss:$2 sm:$0xff]
      %s1232 = scalar_lea.vmem [#allocation2], 176
      %v1233 = vld [vmem:[%s1232] ss:$2 sm:$0xff]
      %s1234 = scalar_lea.vmem [#allocation2], 192
      %v1235 = vld [vmem:[%s1234] ss:$2 sm:$0xff]
      %s1236 = scalar_lea.vmem [#allocation2], 208
      %v1237 = vld [vmem:[%s1236] ss:$2 sm:$0xff]
      %s1238 = scalar_lea.vmem [#allocation2], 224
      %v1239 = vld [vmem:[%s1238] ss:$2 sm:$0xff]
      %s1240 = scalar_lea.vmem [#allocation2], 240
      %v1241 = vld [vmem:[%s1240] ss:$2 sm:$0xff]
      %s1242 = scalar_lea.vmem [#allocation2], 1
      %v1243 = vld [vmem:[%s1242] ss:$2 sm:$0xff]
      %s1244 = scalar_lea.vmem [#allocation2], 17
      %v1245 = vld [vmem:[%s1244] ss:$2 sm:$0xff]
      %s1246 = scalar_lea.vmem [#allocation2], 33
      %v1247 = vld [vmem:[%s1246] ss:$2 sm:$0xff]
      %s1248 = scalar_lea.vmem [#allocation2], 49
      %v1249 = vld [vmem:[%s1248] ss:$2 sm:$0xff]
      %s1250 = scalar_lea.vmem [#allocation2], 65
      %v1251 = vld [vmem:[%s1250] ss:$2 sm:$0xff]
      %s1252 = scalar_lea.vmem [#allocation2], 81
      %v1253 = vld [vmem:[%s1252] ss:$2 sm:$0xff]
      %s1254 = scalar_lea.vmem [#allocation2], 97
      %v1255 = vld [vmem:[%s1254] ss:$2 sm:$0xff]
      %s1256 = scalar_lea.vmem [#allocation2], 113
      %v1257 = vld [vmem:[%s1256] ss:$2 sm:$0xff]
      %s1258 = scalar_lea.vmem [#allocation2], 129
      %v1259 = vld [vmem:[%s1258] ss:$2 sm:$0xff]
      %s1260 = scalar_lea.vmem [#allocation2], 145
      %v1261 = vld [vmem:[%s1260] ss:$2 sm:$0xff]
      %s1262 = scalar_lea.vmem [#allocation2], 161
      %v1263 = vld [vmem:[%s1262] ss:$2 sm:$0xff]
      %s1264 = scalar_lea.vmem [#allocation2], 177
      %v1265 = vld [vmem:[%s1264] ss:$2 sm:$0xff]
      %s1266 = scalar_lea.vmem [#allocation2], 193
      %v1267 = vld [vmem:[%s1266] ss:$2 sm:$0xff]
      %s1268 = scalar_lea.vmem [#allocation2], 209
      %v1269 = vld [vmem:[%s1268] ss:$2 sm:$0xff]
      %s1270 = scalar_lea.vmem [#allocation2], 225
      %v1271 = vld [vmem:[%s1270] ss:$2 sm:$0xff]
      %s1272 = scalar_lea.vmem [#allocation2], 241
      %v1273 = vld [vmem:[%s1272] ss:$2 sm:$0xff]
      %v1274 = vmax.f32 %v1211, %v1243
      %v1275 = vmax.f32 %v1213, %v1245
      %v1276 = vmax.f32 %v1215, %v1247
      %v1277 = vmax.f32 %v1217, %v1249
      %v1278 = vmax.f32 %v1219, %v1251
      %v1279 = vmax.f32 %v1221, %v1253
      %v1280 = vmax.f32 %v1223, %v1255
      %v1281 = vmax.f32 %v1225, %v1257
      %v1282 = vmax.f32 %v1227, %v1259
      %v1283 = vmax.f32 %v1229, %v1261
      %v1284 = vmax.f32 %v1231, %v1263
      %v1285 = vmax.f32 %v1233, %v1265
      %v1286 = vmax.f32 %v1235, %v1267
      %v1287 = vmax.f32 %v1237, %v1269
      %v1288 = vmax.f32 %v1239, %v1271
      %v1289 = vmax.f32 %v1241, %v1273
      %v1290 = vmax.f32 %v1274, %v1275
      %v1291 = vmax.f32 %v1276, %v1277
      %v1292 = vmax.f32 %v1278, %v1279
      %v1293 = vmax.f32 %v1280, %v1281
      %v1294 = vmax.f32 %v1282, %v1283
      %v1295 = vmax.f32 %v1284, %v1285
      %v1296 = vmax.f32 %v1286, %v1287
      %v1297 = vmax.f32 %v1288, %v1289
      %1298 = vst [vmem:[%s197] sm:$0xff] %v1290
      %1299 = vst [vmem:[%s197 + $0x8] sm:$0xff] %v1291
      %1300 = vst [vmem:[%s197 + $0x10] sm:$0xff] %v1292
      %1301 = vst [vmem:[%s197 + $0x18] sm:$0xff] %v1293
      %1302 = vst [vmem:[%s197 + $0x20] sm:$0xff] %v1294
      %1303 = vst [vmem:[%s197 + $0x28] sm:$0xff] %v1295
      %1304 = vst [vmem:[%s197 + $0x30] sm:$0xff] %v1296
      %1305 = vst [vmem:[%s197 + $0x38] sm:$0xff] %v1297
      %s1306 = smul.u32 8, %s15
      %p1307 = scmp.lt.s32.totalorder %s1306, 15
      %s1308 = scalar_select %p1307, %s1306, 15
      %s1309 = smul.addr %s1308, 8
      %s1310 = scalar_lea.vmem %s4, %s1309
      // Predicated region
      $region37: #{conv_block_forward.3} parent=35 // pred_check
        %p1311 = pneg %p122
      $region38: #{conv_block_forward.3} parent=35 // pred_check_branch
        %1313 = sbr.rel (%p1311) target = $region40
      $region39: #{conv_block_forward.3} parent=35 // pred_region
        %s1314 = smul.u32 8, %s15
      $region40: #{conv_block_forward.3} parent=35 // pred_fallthru
        _
    $region36: #{conv_block_forward.3} parent=5 // pred_fallthru
      _
    %p1315 = scmp.le.s32.totalorder 2, %s10
    // Predicated region
    $region41: #{conv_block_forward.3} parent=5 // pred_check
      %p1316 = pneg %p1315
    $region42: #{conv_block_forward.3} parent=5 // pred_check_branch
      %1318 = sbr.rel (%p1316) target = $region44
    $region43: #{conv_block_forward.3} parent=5 // pred_region
      %s1319 = ssub.s32 %s10, 2
      // Predicated region
      $region45: #{conv_block_forward.3} parent=43 // pred_check
        %p1320 = pneg %p128
      $region46: #{conv_block_forward.3} parent=43 // pred_check_branch
        %1322 = sbr.rel (%p1320) target = $region48
      $region47: #{conv_block_forward.3} parent=43 // pred_region
        %s1323 = smul.u32 8, %s16
        %p1324 = scmp.lt.s32.totalorder %s1323, 15
        %s1325 = scalar_select %p1324, %s1323, 15
        %s1326 = smul.addr %s1325, 8
        %s1327 = scalar_lea.vmem %s4, %s1326
      $region48: #{conv_block_forward.3} parent=43 // pred_fallthru
        _
    $region44: #{conv_block_forward.3} parent=5 // pred_fallthru
      _
  $region6: #{conv_block_forward.3} parent=0 // loop_footer
    %s14 = sadd.s32 1, %s10
  $region7: #{conv_block_forward.3} parent=0 // loop_footer_branch
    %9 = sbr.rel target = $region3
  $region8: #{conv_block_forward.3} parent=0 // loop_exit
    _

</llo_original>
